<compile_context>
chip_gen: v5e
topology: v5e:2x2
jax: 0.10.0
libtpu: 0.0.40
codegen_flags: <defaults>
</compile_context>

<pallas_src>
import functools

import numpy as np

import jax
import jax.numpy as jnp
from jax.experimental import pallas as pl
from jax.experimental.pallas import tpu as pltpu


# conv1 tap groups: distinct (dy, dx) block offsets of the stride-2 3x3 conv
# expressed on the space-to-depth grid (only top/left padding is reachable).
GROUPS = ((0, 0), (0, -1), (-1, 0), (-1, -1))


# ----------------------------------------------------------------------------
# Fused kernel: conv1 + upsample + conv2+bn1 + conv3 + conv4+bn2 (+ residuals)
# ----------------------------------------------------------------------------
def _fused_resnet_kernel(x_ref, w1g_ref, wu_ref, w2_ref, w3_ref, w4_ref,
                         vec_ref, mask_ref, o_ref, *, W2, L):
    # x_ref   : (4C, L)    space-to-depth input slab for this image-group tile
    # w1g_ref : (4, C2, 4C) conv1 weights grouped by block offset (see GROUPS)
    # wu_ref  : (C2, 4C)   1x1 upsample weights (phase-(0,0) cols; BN1-scaled)
    # w2/3/4  : (9, C2, C2) per-tap 3x3 weights, tap t = (dy+1)*3 + (dx+1)
    #                       (w2 carries the folded BN1 scale)
    # vec_ref : (C2, 5)    [b1, shiftA, b3, scale2, shiftB] column vectors
    # mask_ref: (9, L)     0/1 'same'-padding masks, one row per (dy, dx)
    # o_ref   : (C2, L)    lane-dense output slab
    f32 = jnp.float32
    b1     = vec_ref[:, 0:1]
    shiftA = vec_ref[:, 1:2]   # scale1*(b2 + b_upsample) + (beta1 - scale1*mean1)
    b3     = vec_ref[:, 2:3]
    scale2 = vec_ref[:, 3:4]
    shiftB = vec_ref[:, 4:5]   # scale2*b4 + (beta2 - scale2*mean2)

    # Hoisted (1, L) mask rows; the centre tap (0, 0) is all-ones and skipped.
    mask = mask_ref[...]
    mrow = {(dy, dx): mask[(dy + 1) * 3 + (dx + 1):(dy + 1) * 3 + (dx + 1) + 1, :]
            for dy in (-1, 0, 1) for dx in (-1, 0, 1) if (dy, dx) != (0, 0)}

    def shifted(a, dy, dx):
        # lane j holds (n, oy, ox); we want the value at (oy+dy, ox+dx).
        sh = (-(dy * W2 + dx)) % L          # jnp.roll convention: out[j]=a[j-sh]
        return a if sh == 0 else pltpu.roll(a, sh, axis=1)

    # ---- x_1 = relu(conv1(x)): stride-2 3x3 conv == 4 grouped taps on the
    #      space-to-depth slab (only top/left padding can go out of bounds) ----
    x_in = x_ref[...]
    acc1 = jnp.dot(w1g_ref[0], x_in, preferred_element_type=f32)
    for t in range(1, 4):
        dy, dx = GROUPS[t]
        a = shifted(x_in, dy, dx) * mrow[(dy, dx)]
        acc1 = acc1 + jnp.dot(w1g_ref[t], a, preferred_element_type=f32)
    x1 = jnp.maximum(acc1 + b1, 0.0)

    # ---- x_sample = upsample(x): reads only phase (0,0) of the s2d slab;
    #      BN1 scale is in the weight, bias is folded into shiftA ----
    x_samp = jnp.dot(wu_ref[...], x_in, preferred_element_type=f32)

    def conv3x3(a, w_ref):
        # per-tap accumulation: 9 small MXU matmuls, per-tap masking, no concat
        acc = jnp.dot(w_ref[4], a, preferred_element_type=f32)   # centre tap
        for dy in (-1, 0, 1):
            for dx in (-1, 0, 1):
                if dy == 0 and dx == 0:
                    continue
                t = (dy + 1) * 3 + (dx + 1)
                a_sh = shifted(a, dy, dx) * mrow[(dy, dx)]
                acc = acc + jnp.dot(w_ref[t], a_sh, preferred_element_type=f32)
        return acc

    # ---- x_2 = relu(bn1(conv2(x_1) + x_sample))  (BN1 scale folded into w2) ----
    x2 = jnp.maximum(conv3x3(x1, w2_ref) + x_samp + shiftA, 0.0)

    # ---- x_3 = relu(conv3(x_2)) ----
    x3 = jnp.maximum(conv3x3(x2, w3_ref) + b3, 0.0)

    # ---- out = relu(bn2(conv4(x_3) + x_2)) ----
    t4 = conv3x3(x3, w4_ref) + x2
    o_ref[...] = jnp.maximum(scale2 * t4 + shiftB, 0.0).astype(o_ref.dtype)


def _tap_masks(n_imgs, H2, W2):
    """(9, n_imgs*H2*W2) 0/1 masks: row (dy+1)*3+(dx+1) is 1 where the
    neighbour at (+dy, +dx) is inside the image ('same' zero padding)."""
    HW = H2 * W2
    j = np.arange(n_imgs * HW)
    r = (j % HW) // W2
    c = j % W2
    rows = []
    for dy in (-1, 0, 1):
        for dx in (-1, 0, 1):
            ok = (r + dy >= 0) & (r + dy < H2) & (c + dx >= 0) & (c + dx < W2)
            rows.append(ok.astype(np.float32))
    return jnp.asarray(np.stack(rows, axis=0))


def _images_per_tile(n_imgs, hw, target_lanes=1024):
    """Whole-image lane tiling: smallest divisor of n_imgs whose tile width is
    a multiple of 128 lanes and reaches ~target_lanes; else the largest
    aligned divisor.  Tiles contain whole images so in-kernel rolls never
    fetch across a tile boundary unmasked."""
    divs = [d for d in range(1, n_imgs + 1) if n_imgs % d == 0]
    aligned = [d for d in divs if (d * hw) % 128 == 0] or divs
    for d in aligned:
        if d * hw >= target_lanes:
            return d
    return aligned[-1]


# ----------------------------------------------------------------------------
# Wrapper: NCHW in -> NCHW out (single fused pallas_call over image groups)
# ----------------------------------------------------------------------------
def resnet_forward(x_nchw, params):
    N, C, H, W = x_nchw.shape
    assert H % 2 == 0 and W % 2 == 0, "in-kernel stride-2 conv1 needs even H, W"
    C2 = 2 * C
    H2, W2 = H // 2, W // 2
    HW = H2 * W2
    L = N * HW
    x = x_nchw.astype(jnp.float32)

    # -- space-to-depth, channel-major: s2d[(py*2+px)*C + c, n*HW + oy*W2 + ox]
    #    = x[n, c, 2*oy + py, 2*ox + px].  One pass over the input volume. --
    s2d = (x.reshape(N, C, H2, 2, W2, 2)
             .transpose(3, 5, 1, 0, 2, 4)
             .reshape(4 * C, L))

    # -- fold conv biases + inference-mode BatchNorm into per-channel affines --
    eps = 1e-5
    scale1 = params['bn1_gamma'] / jnp.sqrt(params['bn1_var'] + eps)
    shift1 = params['bn1_beta'] - scale1 * params['bn1_mean']
    scale2 = params['bn2_gamma'] / jnp.sqrt(params['bn2_var'] + eps)
    shift2 = params['bn2_beta'] - scale2 * params['bn2_mean']
    shiftA = scale1 * (params['conv2_b'] + params['ups_b']) + shift1
    shiftB = scale2 * params['conv4_b'] + shift2
    vecs = jnp.stack([params['conv1_b'], shiftA, params['conv3_b'],
                      scale2, shiftB], axis=1)                     # (C2, 5)

    # -- conv1 weights grouped by block offset (dy, dx) on the s2d channels --
    #    ky/kx: 0 -> (offset -1, phase 1); 1 -> (0, 0); 2 -> (0, 1)
    k_map = {0: (-1, 1), 1: (0, 0), 2: (0, 1)}
    gidx = {g: i for i, g in enumerate(GROUPS)}
    w1 = params['conv1_w']
    w1g = jnp.zeros((4, C2, 4 * C), jnp.float32)
    for ky in range(3):
        dy, py = k_map[ky]
        for kx in range(3):
            dx, px = k_map[kx]
            col = (py * 2 + px) * C
            w1g = w1g.at[gidx[(dy, dx)], :, col:col + C].set(w1[:, :, ky, kx])

    # -- 1x1 upsample reads phase (0,0) only; BN1 scale folded in --
    wu_big = jnp.zeros((C2, 4 * C), jnp.float32)
    wu_big = wu_big.at[:, 0:C].set(params['ups_w'].reshape(C2, C)
                                   * scale1[:, None])

    # -- 3x3 weights as (9, C2, C2), tap t = ky*3+kx; BN1 scale folded into w2 --
    def taps(w):
        return w.transpose(2, 3, 0, 1).reshape(9, C2, C2)
    w2r = taps(params['conv2_w'] * scale1[:, None, None, None])
    w3r = taps(params['conv3_w'])
    w4r = taps(params['conv4_w'])

    # -- whole-image lane tiling ("parallel" grid axis; weights stay resident) --
    g_imgs = _images_per_tile(N, HW)
    n_tiles = N // g_imgs
    L_tile = g_imgs * HW
    mask9 = _tap_masks(g_imgs, H2, W2)                             # (9, L_tile)

    # explicit VMEM budget (tiled ins/outs double-buffered + live intermediates)
    est = 4 * L_tile * (2 * (4 * C + C2) + 9 + 12 * C2)
    vmem_limit = int(min(max(4 * est, 16 << 20), 48 << 20))

    kern = functools.partial(_fused_resnet_kernel, W2=W2, L=L_tile)
    tiled = lambda i: (0, i)
    res2 = lambda i: (0, 0)
    res3 = lambda i: (0, 0, 0)
    out = pl.pallas_call(
        kern,
        out_shape=jax.ShapeDtypeStruct((C2, L), jnp.float32),
        grid_spec=pltpu.PrefetchScalarGridSpec(
            num_scalar_prefetch=0,
            grid=(n_tiles,),
            in_specs=[
                pl.BlockSpec((4 * C, L_tile), tiled),     # s2d input slab
                pl.BlockSpec((4, C2, 4 * C), res3),       # conv1 group weights
                pl.BlockSpec((C2, 4 * C), res2),          # upsample weights
                pl.BlockSpec((9, C2, C2), res3),          # conv2 taps (BN1-scaled)
                pl.BlockSpec((9, C2, C2), res3),          # conv3 taps
                pl.BlockSpec((9, C2, C2), res3),          # conv4 taps
                pl.BlockSpec((C2, 5), res2),              # folded column vectors
                pl.BlockSpec((9, L_tile), res2),          # per-tap padding masks
            ],
            out_specs=pl.BlockSpec((C2, L_tile), tiled),
        ),
        compiler_params=pltpu.CompilerParams(
            dimension_semantics=("parallel",),
            vmem_limit_bytes=vmem_limit),
    )(s2d, w1g, wu_big, w2r, w3r, w4r, vecs, mask9)

    # (C2, N*H2*W2) channel-major slab -> NCHW.  (Drop this transpose when
    # chaining blocks that consume the channel-major layout directly.)
    return out.reshape(C2, N, H2, W2).transpose(1, 0, 2, 3)


# ----------------------------------------------------------------------------
# Deterministic parameter construction (PyTorch-layout weights)
# ----------------------------------------------------------------------------
def make_params(in_channels, seed=0):
    C = in_channels
    C2 = 2 * C
    ks = jax.random.split(jax.random.PRNGKey(seed), 18)

    def w(k, o, i, kh, kw):
        return 0.1 * jax.random.normal(k, (o, i, kh, kw), jnp.float32)

    def v(k, n):
        return 0.1 * jax.random.normal(k, (n,), jnp.float32)

    return {
        'conv1_w': w(ks[0], C2, C, 3, 3),  'conv1_b': v(ks[1], C2),
        'conv2_w': w(ks[2], C2, C2, 3, 3), 'conv2_b': v(ks[3], C2),
        'conv3_w': w(ks[4], C2, C2, 3, 3), 'conv3_b': v(ks[5], C2),
        'conv4_w': w(ks[6], C2, C2, 3, 3), 'conv4_b': v(ks[7], C2),
        'ups_w':   w(ks[8], C2, C, 1, 1),  'ups_b':   v(ks[9], C2),
        'bn1_gamma': 1.0 + v(ks[10], C2), 'bn1_beta': v(ks[11], C2),
        'bn1_mean':  v(ks[12], C2),
        'bn1_var':   jax.random.uniform(ks[13], (C2,), jnp.float32, 0.5, 1.5),
        'bn2_gamma': 1.0 + v(ks[14], C2), 'bn2_beta': v(ks[15], C2),
        'bn2_mean':  v(ks[16], C2),
        'bn2_var':   jax.random.uniform(ks[17], (C2,), jnp.float32, 0.5, 1.5),
    }


# ----------------------------------------------------------------------------
# Pure-XLA reference (same math as the PyTorch module, inference-mode BN)
# ----------------------------------------------------------------------------
def resnet_reference(x, p):
    eps = 1e-5

    def conv(x, w, b, stride, pad):
        y = jax.lax.conv_general_dilated(
            x, w, (stride, stride), [(pad, pad), (pad, pad)],
            dimension_numbers=('NCHW', 'OIHW', 'NCHW'),
            precision=jax.lax.Precision.HIGHEST)
        return y + b.reshape(1, -1, 1, 1)

    def bn(y, g, b, m, v):
        g, b, m, v = (a.reshape(1, -1, 1, 1) for a in (g, b, m, v))
        return g * (y - m) / jnp.sqrt(v + eps) + b

    relu = jax.nn.relu
    x1 = relu(conv(x, p['conv1_w'], p['conv1_b'], 2, 1))
    xs = conv(x, p['ups_w'], p['ups_b'], 2, 0)
    x2 = relu(bn(conv(x1, p['conv2_w'], p['conv2_b'], 1, 1) + xs,
                 p['bn1_gamma'], p['bn1_beta'], p['bn1_mean'], p['bn1_var']))
    x3 = relu(conv(x2, p['conv3_w'], p['conv3_b'], 1, 1))
    x4 = conv(x3, p['conv4_w'], p['conv4_b'], 1, 1)
    return relu(bn(x4 + x2,
                   p['bn2_gamma'], p['bn2_beta'], p['bn2_mean'], p['bn2_var']))


if __name__ == "__main__":
    N, C, H, W = 2, 4, 16, 16
    x = jax.random.normal(jax.random.PRNGKey(0), (N, C, H, W), jnp.float32)  # NCHW
    params = make_params(C, seed=0)

    out = jax.jit(resnet_forward)(x, params)
    out = jax.block_until_ready(out)

    assert out.shape == (N, 2 * C, H // 2, W // 2), out.shape
    assert out.dtype == jnp.float32
    assert bool(jnp.all(jnp.isfinite(out)))

    ref = resnet_reference(x, params)
    max_diff = float(jnp.max(jnp.abs(out - ref)))
    assert max_diff < 2e-2, f"max |pallas - reference| = {max_diff}"
    print("KERNEL_OK")
</pallas_src>

<mosaic_0001>
module attributes {stable_mosaic.version = 11 : i64} {
  func.func @_fused_resnet_kernel(%arg0: i32, %arg1: memref<16x128xf32, #tpu.memory_space<vmem>>, %arg2: memref<4x8x16xf32, #tpu.memory_space<vmem>>, %arg3: memref<8x16xf32, #tpu.memory_space<vmem>>, %arg4: memref<9x8x8xf32, #tpu.memory_space<vmem>>, %arg5: memref<9x8x8xf32, #tpu.memory_space<vmem>>, %arg6: memref<9x8x8xf32, #tpu.memory_space<vmem>>, %arg7: memref<8x5xf32, #tpu.memory_space<vmem>>, %arg8: memref<9x128xf32, #tpu.memory_space<vmem>>, %arg9: memref<8x128xf32, #tpu.memory_space<vmem>>) attributes {dimension_semantics = [#tpu.dimension_semantics<parallel>], iteration_bounds = array<i64: 1>, scalar_prefetch = 0 : i64, scratch_operands = 0 : i64, tpu.core_type = #tpu.core_type<tc>, window_params = [{transform_indices = @transform_0, window_bounds = array<i64: 16, 128>}, {pipeline_mode = #tpu.pipeline_mode<synchronous>, transform_indices = @transform_1, window_bounds = array<i64: 4, 8, 16>}, {pipeline_mode = #tpu.pipeline_mode<synchronous>, transform_indices = @transform_2, window_bounds = array<i64: 8, 16>}, {pipeline_mode = #tpu.pipeline_mode<synchronous>, transform_indices = @transform_3, window_bounds = array<i64: 9, 8, 8>}, {pipeline_mode = #tpu.pipeline_mode<synchronous>, transform_indices = @transform_4, window_bounds = array<i64: 9, 8, 8>}, {pipeline_mode = #tpu.pipeline_mode<synchronous>, transform_indices = @transform_5, window_bounds = array<i64: 9, 8, 8>}, {pipeline_mode = #tpu.pipeline_mode<synchronous>, transform_indices = @transform_6, window_bounds = array<i64: 8, 5>}, {pipeline_mode = #tpu.pipeline_mode<synchronous>, transform_indices = @transform_7, window_bounds = array<i64: 9, 128>}, {transform_indices = @transform_8, window_bounds = array<i64: 8, 128>}]} {
    %c0 = arith.constant 0 : index
    %c0_0 = arith.constant 0 : index
    %0 = vector.load %arg7[%c0, %c0_0] : memref<8x5xf32, #tpu.memory_space<vmem>>, vector<8x1xf32>
    %c0_1 = arith.constant 0 : index
    %c1 = arith.constant 1 : index
    %1 = vector.load %arg7[%c0_1, %c1] : memref<8x5xf32, #tpu.memory_space<vmem>>, vector<8x1xf32>
    %c0_2 = arith.constant 0 : index
    %c2 = arith.constant 2 : index
    %2 = vector.load %arg7[%c0_2, %c2] : memref<8x5xf32, #tpu.memory_space<vmem>>, vector<8x1xf32>
    %c0_3 = arith.constant 0 : index
    %c3 = arith.constant 3 : index
    %3 = vector.load %arg7[%c0_3, %c3] : memref<8x5xf32, #tpu.memory_space<vmem>>, vector<8x1xf32>
    %c0_4 = arith.constant 0 : index
    %c4 = arith.constant 4 : index
    %4 = vector.load %arg7[%c0_4, %c4] : memref<8x5xf32, #tpu.memory_space<vmem>>, vector<8x1xf32>
    %c0_5 = arith.constant 0 : index
    %c0_6 = arith.constant 0 : index
    %5 = vector.load %arg8[%c0_5, %c0_6] : memref<9x128xf32, #tpu.memory_space<vmem>>, vector<9x128xf32>
    %6 = vector.extract_strided_slice %5 {offsets = [0, 0], sizes = [1, 128], strides = [1, 1]} : vector<9x128xf32> to vector<1x128xf32>
    %7 = vector.extract_strided_slice %5 {offsets = [1, 0], sizes = [1, 128], strides = [1, 1]} : vector<9x128xf32> to vector<1x128xf32>
    %8 = vector.extract_strided_slice %5 {offsets = [2, 0], sizes = [1, 128], strides = [1, 1]} : vector<9x128xf32> to vector<1x128xf32>
    %9 = vector.extract_strided_slice %5 {offsets = [3, 0], sizes = [1, 128], strides = [1, 1]} : vector<9x128xf32> to vector<1x128xf32>
    %10 = vector.extract_strided_slice %5 {offsets = [5, 0], sizes = [1, 128], strides = [1, 1]} : vector<9x128xf32> to vector<1x128xf32>
    %11 = vector.extract_strided_slice %5 {offsets = [6, 0], sizes = [1, 128], strides = [1, 1]} : vector<9x128xf32> to vector<1x128xf32>
    %12 = vector.extract_strided_slice %5 {offsets = [7, 0], sizes = [1, 128], strides = [1, 1]} : vector<9x128xf32> to vector<1x128xf32>
    %13 = vector.extract_strided_slice %5 {offsets = [8, 0], sizes = [1, 128], strides = [1, 1]} : vector<9x128xf32> to vector<1x128xf32>
    %c0_7 = arith.constant 0 : index
    %c0_8 = arith.constant 0 : index
    %14 = vector.load %arg1[%c0_7, %c0_8] : memref<16x128xf32, #tpu.memory_space<vmem>>, vector<16x128xf32>
    %c0_9 = arith.constant 0 : index
    %c0_10 = arith.constant 0 : index
    %c0_11 = arith.constant 0 : index
    %15 = vector.load %arg2[%c0_9, %c0_10, %c0_11] : memref<4x8x16xf32, #tpu.memory_space<vmem>>, vector<1x8x16xf32>
    %16 = vector.shape_cast %15 : vector<1x8x16xf32> to vector<8x16xf32>
    %cst = arith.constant dense<0.000000e+00> : vector<8x128xf32>
    %17 = tpu.matmul %16, %14, %cst {dimension_numbers = #tpu.dot_dimension_numbers<[1], [0], [0], [1], [0, 0, 1, 1], [], []>} : vector<8x16xf32>, vector<16x128xf32>, vector<8x128xf32> -> vector<8x128xf32>
    %c1_i32 = arith.constant 1 : i32
    %18 = tpu.dynamic_rotate %14 by %c1_i32 dim 1 : vector<16x128xf32>, i32 -> vector<16x128xf32>
    %19 = vector.broadcast %9 : vector<1x128xf32> to vector<16x128xf32>
    %20 = arith.mulf %18, %19 : vector<16x128xf32>
    %c1_12 = arith.constant 1 : index
    %c0_13 = arith.constant 0 : index
    %c0_14 = arith.constant 0 : index
    %21 = vector.load %arg2[%c1_12, %c0_13, %c0_14] : memref<4x8x16xf32, #tpu.memory_space<vmem>>, vector<1x8x16xf32>
    %22 = vector.shape_cast %21 : vector<1x8x16xf32> to vector<8x16xf32>
    %cst_15 = arith.constant dense<0.000000e+00> : vector<8x128xf32>
    %23 = tpu.matmul %22, %20, %cst_15 {dimension_numbers = #tpu.dot_dimension_numbers<[1], [0], [0], [1], [0, 0, 1, 1], [], []>} : vector<8x16xf32>, vector<16x128xf32>, vector<8x128xf32> -> vector<8x128xf32>
    %24 = arith.addf %17, %23 : vector<8x128xf32>
    %c8_i32 = arith.constant 8 : i32
    %25 = tpu.dynamic_rotate %14 by %c8_i32 dim 1 : vector<16x128xf32>, i32 -> vector<16x128xf32>
    %26 = vector.broadcast %7 : vector<1x128xf32> to vector<16x128xf32>
    %27 = arith.mulf %25, %26 : vector<16x128xf32>
    %c2_16 = arith.constant 2 : index
    %c0_17 = arith.constant 0 : index
    %c0_18 = arith.constant 0 : index
    %28 = vector.load %arg2[%c2_16, %c0_17, %c0_18] : memref<4x8x16xf32, #tpu.memory_space<vmem>>, vector<1x8x16xf32>
    %29 = vector.shape_cast %28 : vector<1x8x16xf32> to vector<8x16xf32>
    %cst_19 = arith.constant dense<0.000000e+00> : vector<8x128xf32>
    %30 = tpu.matmul %29, %27, %cst_19 {dimension_numbers = #tpu.dot_dimension_numbers<[1], [0], [0], [1], [0, 0, 1, 1], [], []>} : vector<8x16xf32>, vector<16x128xf32>, vector<8x128xf32> -> vector<8x128xf32>
    %31 = arith.addf %24, %30 : vector<8x128xf32>
    %c9_i32 = arith.constant 9 : i32
    %32 = tpu.dynamic_rotate %14 by %c9_i32 dim 1 : vector<16x128xf32>, i32 -> vector<16x128xf32>
    %33 = vector.broadcast %6 : vector<1x128xf32> to vector<16x128xf32>
    %34 = arith.mulf %32, %33 : vector<16x128xf32>
    %c3_20 = arith.constant 3 : index
    %c0_21 = arith.constant 0 : index
    %c0_22 = arith.constant 0 : index
    %35 = vector.load %arg2[%c3_20, %c0_21, %c0_22] : memref<4x8x16xf32, #tpu.memory_space<vmem>>, vector<1x8x16xf32>
    %36 = vector.shape_cast %35 : vector<1x8x16xf32> to vector<8x16xf32>
    %cst_23 = arith.constant dense<0.000000e+00> : vector<8x128xf32>
    %37 = tpu.matmul %36, %34, %cst_23 {dimension_numbers = #tpu.dot_dimension_numbers<[1], [0], [0], [1], [0, 0, 1, 1], [], []>} : vector<8x16xf32>, vector<16x128xf32>, vector<8x128xf32> -> vector<8x128xf32>
    %38 = arith.addf %31, %37 : vector<8x128xf32>
    %39 = vector.broadcast %0 : vector<8x1xf32> to vector<8x128xf32>
    %40 = arith.addf %38, %39 : vector<8x128xf32>
    %cst_24 = arith.constant 0.000000e+00 : f32
    %41 = vector.broadcast %cst_24 : f32 to vector<8x128xf32>
    %42 = arith.maximumf %40, %41 : vector<8x128xf32>
    %c0_25 = arith.constant 0 : index
    %c0_26 = arith.constant 0 : index
    %43 = vector.load %arg3[%c0_25, %c0_26] : memref<8x16xf32, #tpu.memory_space<vmem>>, vector<8x16xf32>
    %cst_27 = arith.constant dense<0.000000e+00> : vector<8x128xf32>
    %44 = tpu.matmul %43, %14, %cst_27 {dimension_numbers = #tpu.dot_dimension_numbers<[1], [0], [0], [1], [0, 0, 1, 1], [], []>} : vector<8x16xf32>, vector<16x128xf32>, vector<8x128xf32> -> vector<8x128xf32>
    %c4_28 = arith.constant 4 : index
    %c0_29 = arith.constant 0 : index
    %c0_30 = arith.constant 0 : index
    %45 = vector.load %arg4[%c4_28, %c0_29, %c0_30] : memref<9x8x8xf32, #tpu.memory_space<vmem>>, vector<1x8x8xf32>
    %46 = vector.shape_cast %45 : vector<1x8x8xf32> to vector<8x8xf32>
    %cst_31 = arith.constant dense<0.000000e+00> : vector<8x128xf32>
    %47 = tpu.matmul %46, %42, %cst_31 {dimension_numbers = #tpu.dot_dimension_numbers<[1], [0], [0], [1], [0, 0, 1, 1], [], []>} : vector<8x8xf32>, vector<8x128xf32>, vector<8x128xf32> -> vector<8x128xf32>
    %c9_i32_32 = arith.constant 9 : i32
    %48 = tpu.dynamic_rotate %42 by %c9_i32_32 dim 1 : vector<8x128xf32>, i32 -> vector<8x128xf32>
    %49 = vector.broadcast %6 : vector<1x128xf32> to vector<8x128xf32>
    %50 = arith.mulf %48, %49 : vector<8x128xf32>
    %c0_33 = arith.constant 0 : index
    %c0_34 = arith.constant 0 : index
    %c0_35 = arith.constant 0 : index
    %51 = vector.load %arg4[%c0_33, %c0_34, %c0_35] : memref<9x8x8xf32, #tpu.memory_space<vmem>>, vector<1x8x8xf32>
    %52 = vector.shape_cast %51 : vector<1x8x8xf32> to vector<8x8xf32>
    %cst_36 = arith.constant dense<0.000000e+00> : vector<8x128xf32>
    %53 = tpu.matmul %52, %50, %cst_36 {dimension_numbers = #tpu.dot_dimension_numbers<[1], [0], [0], [1], [0, 0, 1, 1], [], []>} : vector<8x8xf32>, vector<8x128xf32>, vector<8x128xf32> -> vector<8x128xf32>
    %54 = arith.addf %47, %53 : vector<8x128xf32>
    %c8_i32_37 = arith.constant 8 : i32
    %55 = tpu.dynamic_rotate %42 by %c8_i32_37 dim 1 : vector<8x128xf32>, i32 -> vector<8x128xf32>
    %56 = vector.broadcast %7 : vector<1x128xf32> to vector<8x128xf32>
    %57 = arith.mulf %55, %56 : vector<8x128xf32>
    %c1_38 = arith.constant 1 : index
    %c0_39 = arith.constant 0 : index
    %c0_40 = arith.constant 0 : index
    %58 = vector.load %arg4[%c1_38, %c0_39, %c0_40] : memref<9x8x8xf32, #tpu.memory_space<vmem>>, vector<1x8x8xf32>
    %59 = vector.shape_cast %58 : vector<1x8x8xf32> to vector<8x8xf32>
    %cst_41 = arith.constant dense<0.000000e+00> : vector<8x128xf32>
    %60 = tpu.matmul %59, %57, %cst_41 {dimension_numbers = #tpu.dot_dimension_numbers<[1], [0], [0], [1], [0, 0, 1, 1], [], []>} : vector<8x8xf32>, vector<8x128xf32>, vector<8x128xf32> -> vector<8x128xf32>
    %61 = arith.addf %54, %60 : vector<8x128xf32>
    %c7_i32 = arith.constant 7 : i32
    %62 = tpu.dynamic_rotate %42 by %c7_i32 dim 1 : vector<8x128xf32>, i32 -> vector<8x128xf32>
    %63 = vector.broadcast %8 : vector<1x128xf32> to vector<8x128xf32>
    %64 = arith.mulf %62, %63 : vector<8x128xf32>
    %c2_42 = arith.constant 2 : index
    %c0_43 = arith.constant 0 : index
    %c0_44 = arith.constant 0 : index
    %65 = vector.load %arg4[%c2_42, %c0_43, %c0_44] : memref<9x8x8xf32, #tpu.memory_space<vmem>>, vector<1x8x8xf32>
    %66 = vector.shape_cast %65 : vector<1x8x8xf32> to vector<8x8xf32>
    %cst_45 = arith.constant dense<0.000000e+00> : vector<8x128xf32>
    %67 = tpu.matmul %66, %64, %cst_45 {dimension_numbers = #tpu.dot_dimension_numbers<[1], [0], [0], [1], [0, 0, 1, 1], [], []>} : vector<8x8xf32>, vector<8x128xf32>, vector<8x128xf32> -> vector<8x128xf32>
    %68 = arith.addf %61, %67 : vector<8x128xf32>
    %c1_i32_46 = arith.constant 1 : i32
    %69 = tpu.dynamic_rotate %42 by %c1_i32_46 dim 1 : vector<8x128xf32>, i32 -> vector<8x128xf32>
    %70 = vector.broadcast %9 : vector<1x128xf32> to vector<8x128xf32>
    %71 = arith.mulf %69, %70 : vector<8x128xf32>
    %c3_47 = arith.constant 3 : index
    %c0_48 = arith.constant 0 : index
    %c0_49 = arith.constant 0 : index
    %72 = vector.load %arg4[%c3_47, %c0_48, %c0_49] : memref<9x8x8xf32, #tpu.memory_space<vmem>>, vector<1x8x8xf32>
    %73 = vector.shape_cast %72 : vector<1x8x8xf32> to vector<8x8xf32>
    %cst_50 = arith.constant dense<0.000000e+00> : vector<8x128xf32>
    %74 = tpu.matmul %73, %71, %cst_50 {dimension_numbers = #tpu.dot_dimension_numbers<[1], [0], [0], [1], [0, 0, 1, 1], [], []>} : vector<8x8xf32>, vector<8x128xf32>, vector<8x128xf32> -> vector<8x128xf32>
    %75 = arith.addf %68, %74 : vector<8x128xf32>
    %c127_i32 = arith.constant 127 : i32
    %76 = tpu.dynamic_rotate %42 by %c127_i32 dim 1 : vector<8x128xf32>, i32 -> vector<8x128xf32>
    %77 = vector.broadcast %10 : vector<1x128xf32> to vector<8x128xf32>
    %78 = arith.mulf %76, %77 : vector<8x128xf32>
    %c5 = arith.constant 5 : index
    %c0_51 = arith.constant 0 : index
    %c0_52 = arith.constant 0 : index
    %79 = vector.load %arg4[%c5, %c0_51, %c0_52] : memref<9x8x8xf32, #tpu.memory_space<vmem>>, vector<1x8x8xf32>
    %80 = vector.shape_cast %79 : vector<1x8x8xf32> to vector<8x8xf32>
    %cst_53 = arith.constant dense<0.000000e+00> : vector<8x128xf32>
    %81 = tpu.matmul %80, %78, %cst_53 {dimension_numbers = #tpu.dot_dimension_numbers<[1], [0], [0], [1], [0, 0, 1, 1], [], []>} : vector<8x8xf32>, vector<8x128xf32>, vector<8x128xf32> -> vector<8x128xf32>
    %82 = arith.addf %75, %81 : vector<8x128xf32>
    %c121_i32 = arith.constant 121 : i32
    %83 = tpu.dynamic_rotate %42 by %c121_i32 dim 1 : vector<8x128xf32>, i32 -> vector<8x128xf32>
    %84 = vector.broadcast %11 : vector<1x128xf32> to vector<8x128xf32>
    %85 = arith.mulf %83, %84 : vector<8x128xf32>
    %c6 = arith.constant 6 : index
    %c0_54 = arith.constant 0 : index
    %c0_55 = arith.constant 0 : index
    %86 = vector.load %arg4[%c6, %c0_54, %c0_55] : memref<9x8x8xf32, #tpu.memory_space<vmem>>, vector<1x8x8xf32>
    %87 = vector.shape_cast %86 : vector<1x8x8xf32> to vector<8x8xf32>
    %cst_56 = arith.constant dense<0.000000e+00> : vector<8x128xf32>
    %88 = tpu.matmul %87, %85, %cst_56 {dimension_numbers = #tpu.dot_dimension_numbers<[1], [0], [0], [1], [0, 0, 1, 1], [], []>} : vector<8x8xf32>, vector<8x128xf32>, vector<8x128xf32> -> vector<8x128xf32>
    %89 = arith.addf %82, %88 : vector<8x128xf32>
    %c120_i32 = arith.constant 120 : i32
    %90 = tpu.dynamic_rotate %42 by %c120_i32 dim 1 : vector<8x128xf32>, i32 -> vector<8x128xf32>
    %91 = vector.broadcast %12 : vector<1x128xf32> to vector<8x128xf32>
    %92 = arith.mulf %90, %91 : vector<8x128xf32>
    %c7 = arith.constant 7 : index
    %c0_57 = arith.constant 0 : index
    %c0_58 = arith.constant 0 : index
    %93 = vector.load %arg4[%c7, %c0_57, %c0_58] : memref<9x8x8xf32, #tpu.memory_space<vmem>>, vector<1x8x8xf32>
    %94 = vector.shape_cast %93 : vector<1x8x8xf32> to vector<8x8xf32>
    %cst_59 = arith.constant dense<0.000000e+00> : vector<8x128xf32>
    %95 = tpu.matmul %94, %92, %cst_59 {dimension_numbers = #tpu.dot_dimension_numbers<[1], [0], [0], [1], [0, 0, 1, 1], [], []>} : vector<8x8xf32>, vector<8x128xf32>, vector<8x128xf32> -> vector<8x128xf32>
    %96 = arith.addf %89, %95 : vector<8x128xf32>
    %c119_i32 = arith.constant 119 : i32
    %97 = tpu.dynamic_rotate %42 by %c119_i32 dim 1 : vector<8x128xf32>, i32 -> vector<8x128xf32>
    %98 = vector.broadcast %13 : vector<1x128xf32> to vector<8x128xf32>
    %99 = arith.mulf %97, %98 : vector<8x128xf32>
    %c8 = arith.constant 8 : index
    %c0_60 = arith.constant 0 : index
    %c0_61 = arith.constant 0 : index
    %100 = vector.load %arg4[%c8, %c0_60, %c0_61] : memref<9x8x8xf32, #tpu.memory_space<vmem>>, vector<1x8x8xf32>
    %101 = vector.shape_cast %100 : vector<1x8x8xf32> to vector<8x8xf32>
    %cst_62 = arith.constant dense<0.000000e+00> : vector<8x128xf32>
    %102 = tpu.matmul %101, %99, %cst_62 {dimension_numbers = #tpu.dot_dimension_numbers<[1], [0], [0], [1], [0, 0, 1, 1], [], []>} : vector<8x8xf32>, vector<8x128xf32>, vector<8x128xf32> -> vector<8x128xf32>
    %103 = arith.addf %96, %102 : vector<8x128xf32>
    %104 = arith.addf %103, %44 : vector<8x128xf32>
    %105 = vector.broadcast %1 : vector<8x1xf32> to vector<8x128xf32>
    %106 = arith.addf %104, %105 : vector<8x128xf32>
    %cst_63 = arith.constant 0.000000e+00 : f32
    %107 = vector.broadcast %cst_63 : f32 to vector<8x128xf32>
    %108 = arith.maximumf %106, %107 : vector<8x128xf32>
    %c4_64 = arith.constant 4 : index
    %c0_65 = arith.constant 0 : index
    %c0_66 = arith.constant 0 : index
    %109 = vector.load %arg5[%c4_64, %c0_65, %c0_66] : memref<9x8x8xf32, #tpu.memory_space<vmem>>, vector<1x8x8xf32>
    %110 = vector.shape_cast %109 : vector<1x8x8xf32> to vector<8x8xf32>
    %cst_67 = arith.constant dense<0.000000e+00> : vector<8x128xf32>
    %111 = tpu.matmul %110, %108, %cst_67 {dimension_numbers = #tpu.dot_dimension_numbers<[1], [0], [0], [1], [0, 0, 1, 1], [], []>} : vector<8x8xf32>, vector<8x128xf32>, vector<8x128xf32> -> vector<8x128xf32>
    %c9_i32_68 = arith.constant 9 : i32
    %112 = tpu.dynamic_rotate %108 by %c9_i32_68 dim 1 : vector<8x128xf32>, i32 -> vector<8x128xf32>
    %113 = vector.broadcast %6 : vector<1x128xf32> to vector<8x128xf32>
    %114 = arith.mulf %112, %113 : vector<8x128xf32>
    %c0_69 = arith.constant 0 : index
    %c0_70 = arith.constant 0 : index
    %c0_71 = arith.constant 0 : index
    %115 = vector.load %arg5[%c0_69, %c0_70, %c0_71] : memref<9x8x8xf32, #tpu.memory_space<vmem>>, vector<1x8x8xf32>
    %116 = vector.shape_cast %115 : vector<1x8x8xf32> to vector<8x8xf32>
    %cst_72 = arith.constant dense<0.000000e+00> : vector<8x128xf32>
    %117 = tpu.matmul %116, %114, %cst_72 {dimension_numbers = #tpu.dot_dimension_numbers<[1], [0], [0], [1], [0, 0, 1, 1], [], []>} : vector<8x8xf32>, vector<8x128xf32>, vector<8x128xf32> -> vector<8x128xf32>
    %118 = arith.addf %111, %117 : vector<8x128xf32>
    %c8_i32_73 = arith.constant 8 : i32
    %119 = tpu.dynamic_rotate %108 by %c8_i32_73 dim 1 : vector<8x128xf32>, i32 -> vector<8x128xf32>
    %120 = vector.broadcast %7 : vector<1x128xf32> to vector<8x128xf32>
    %121 = arith.mulf %119, %120 : vector<8x128xf32>
    %c1_74 = arith.constant 1 : index
    %c0_75 = arith.constant 0 : index
    %c0_76 = arith.constant 0 : index
    %122 = vector.load %arg5[%c1_74, %c0_75, %c0_76] : memref<9x8x8xf32, #tpu.memory_space<vmem>>, vector<1x8x8xf32>
    %123 = vector.shape_cast %122 : vector<1x8x8xf32> to vector<8x8xf32>
    %cst_77 = arith.constant dense<0.000000e+00> : vector<8x128xf32>
    %124 = tpu.matmul %123, %121, %cst_77 {dimension_numbers = #tpu.dot_dimension_numbers<[1], [0], [0], [1], [0, 0, 1, 1], [], []>} : vector<8x8xf32>, vector<8x128xf32>, vector<8x128xf32> -> vector<8x128xf32>
    %125 = arith.addf %118, %124 : vector<8x128xf32>
    %c7_i32_78 = arith.constant 7 : i32
    %126 = tpu.dynamic_rotate %108 by %c7_i32_78 dim 1 : vector<8x128xf32>, i32 -> vector<8x128xf32>
    %127 = vector.broadcast %8 : vector<1x128xf32> to vector<8x128xf32>
    %128 = arith.mulf %126, %127 : vector<8x128xf32>
    %c2_79 = arith.constant 2 : index
    %c0_80 = arith.constant 0 : index
    %c0_81 = arith.constant 0 : index
    %129 = vector.load %arg5[%c2_79, %c0_80, %c0_81] : memref<9x8x8xf32, #tpu.memory_space<vmem>>, vector<1x8x8xf32>
    %130 = vector.shape_cast %129 : vector<1x8x8xf32> to vector<8x8xf32>
    %cst_82 = arith.constant dense<0.000000e+00> : vector<8x128xf32>
    %131 = tpu.matmul %130, %128, %cst_82 {dimension_numbers = #tpu.dot_dimension_numbers<[1], [0], [0], [1], [0, 0, 1, 1], [], []>} : vector<8x8xf32>, vector<8x128xf32>, vector<8x128xf32> -> vector<8x128xf32>
    %132 = arith.addf %125, %131 : vector<8x128xf32>
    %c1_i32_83 = arith.constant 1 : i32
    %133 = tpu.dynamic_rotate %108 by %c1_i32_83 dim 1 : vector<8x128xf32>, i32 -> vector<8x128xf32>
    %134 = vector.broadcast %9 : vector<1x128xf32> to vector<8x128xf32>
    %135 = arith.mulf %133, %134 : vector<8x128xf32>
    %c3_84 = arith.constant 3 : index
    %c0_85 = arith.constant 0 : index
    %c0_86 = arith.constant 0 : index
    %136 = vector.load %arg5[%c3_84, %c0_85, %c0_86] : memref<9x8x8xf32, #tpu.memory_space<vmem>>, vector<1x8x8xf32>
    %137 = vector.shape_cast %136 : vector<1x8x8xf32> to vector<8x8xf32>
    %cst_87 = arith.constant dense<0.000000e+00> : vector<8x128xf32>
    %138 = tpu.matmul %137, %135, %cst_87 {dimension_numbers = #tpu.dot_dimension_numbers<[1], [0], [0], [1], [0, 0, 1, 1], [], []>} : vector<8x8xf32>, vector<8x128xf32>, vector<8x128xf32> -> vector<8x128xf32>
    %139 = arith.addf %132, %138 : vector<8x128xf32>
    %c127_i32_88 = arith.constant 127 : i32
    %140 = tpu.dynamic_rotate %108 by %c127_i32_88 dim 1 : vector<8x128xf32>, i32 -> vector<8x128xf32>
    %141 = vector.broadcast %10 : vector<1x128xf32> to vector<8x128xf32>
    %142 = arith.mulf %140, %141 : vector<8x128xf32>
    %c5_89 = arith.constant 5 : index
    %c0_90 = arith.constant 0 : index
    %c0_91 = arith.constant 0 : index
    %143 = vector.load %arg5[%c5_89, %c0_90, %c0_91] : memref<9x8x8xf32, #tpu.memory_space<vmem>>, vector<1x8x8xf32>
    %144 = vector.shape_cast %143 : vector<1x8x8xf32> to vector<8x8xf32>
    %cst_92 = arith.constant dense<0.000000e+00> : vector<8x128xf32>
    %145 = tpu.matmul %144, %142, %cst_92 {dimension_numbers = #tpu.dot_dimension_numbers<[1], [0], [0], [1], [0, 0, 1, 1], [], []>} : vector<8x8xf32>, vector<8x128xf32>, vector<8x128xf32> -> vector<8x128xf32>
    %146 = arith.addf %139, %145 : vector<8x128xf32>
    %c121_i32_93 = arith.constant 121 : i32
    %147 = tpu.dynamic_rotate %108 by %c121_i32_93 dim 1 : vector<8x128xf32>, i32 -> vector<8x128xf32>
    %148 = vector.broadcast %11 : vector<1x128xf32> to vector<8x128xf32>
    %149 = arith.mulf %147, %148 : vector<8x128xf32>
    %c6_94 = arith.constant 6 : index
    %c0_95 = arith.constant 0 : index
    %c0_96 = arith.constant 0 : index
    %150 = vector.load %arg5[%c6_94, %c0_95, %c0_96] : memref<9x8x8xf32, #tpu.memory_space<vmem>>, vector<1x8x8xf32>
    %151 = vector.shape_cast %150 : vector<1x8x8xf32> to vector<8x8xf32>
    %cst_97 = arith.constant dense<0.000000e+00> : vector<8x128xf32>
    %152 = tpu.matmul %151, %149, %cst_97 {dimension_numbers = #tpu.dot_dimension_numbers<[1], [0], [0], [1], [0, 0, 1, 1], [], []>} : vector<8x8xf32>, vector<8x128xf32>, vector<8x128xf32> -> vector<8x128xf32>
    %153 = arith.addf %146, %152 : vector<8x128xf32>
    %c120_i32_98 = arith.constant 120 : i32
    %154 = tpu.dynamic_rotate %108 by %c120_i32_98 dim 1 : vector<8x128xf32>, i32 -> vector<8x128xf32>
    %155 = vector.broadcast %12 : vector<1x128xf32> to vector<8x128xf32>
    %156 = arith.mulf %154, %155 : vector<8x128xf32>
    %c7_99 = arith.constant 7 : index
    %c0_100 = arith.constant 0 : index
    %c0_101 = arith.constant 0 : index
    %157 = vector.load %arg5[%c7_99, %c0_100, %c0_101] : memref<9x8x8xf32, #tpu.memory_space<vmem>>, vector<1x8x8xf32>
    %158 = vector.shape_cast %157 : vector<1x8x8xf32> to vector<8x8xf32>
    %cst_102 = arith.constant dense<0.000000e+00> : vector<8x128xf32>
    %159 = tpu.matmul %158, %156, %cst_102 {dimension_numbers = #tpu.dot_dimension_numbers<[1], [0], [0], [1], [0, 0, 1, 1], [], []>} : vector<8x8xf32>, vector<8x128xf32>, vector<8x128xf32> -> vector<8x128xf32>
    %160 = arith.addf %153, %159 : vector<8x128xf32>
    %c119_i32_103 = arith.constant 119 : i32
    %161 = tpu.dynamic_rotate %108 by %c119_i32_103 dim 1 : vector<8x128xf32>, i32 -> vector<8x128xf32>
    %162 = vector.broadcast %13 : vector<1x128xf32> to vector<8x128xf32>
    %163 = arith.mulf %161, %162 : vector<8x128xf32>
    %c8_104 = arith.constant 8 : index
    %c0_105 = arith.constant 0 : index
    %c0_106 = arith.constant 0 : index
    %164 = vector.load %arg5[%c8_104, %c0_105, %c0_106] : memref<9x8x8xf32, #tpu.memory_space<vmem>>, vector<1x8x8xf32>
    %165 = vector.shape_cast %164 : vector<1x8x8xf32> to vector<8x8xf32>
    %cst_107 = arith.constant dense<0.000000e+00> : vector<8x128xf32>
    %166 = tpu.matmul %165, %163, %cst_107 {dimension_numbers = #tpu.dot_dimension_numbers<[1], [0], [0], [1], [0, 0, 1, 1], [], []>} : vector<8x8xf32>, vector<8x128xf32>, vector<8x128xf32> -> vector<8x128xf32>
    %167 = arith.addf %160, %166 : vector<8x128xf32>
    %168 = vector.broadcast %2 : vector<8x1xf32> to vector<8x128xf32>
    %169 = arith.addf %167, %168 : vector<8x128xf32>
    %cst_108 = arith.constant 0.000000e+00 : f32
    %170 = vector.broadcast %cst_108 : f32 to vector<8x128xf32>
    %171 = arith.maximumf %169, %170 : vector<8x128xf32>
    %c4_109 = arith.constant 4 : index
    %c0_110 = arith.constant 0 : index
    %c0_111 = arith.constant 0 : index
    %172 = vector.load %arg6[%c4_109, %c0_110, %c0_111] : memref<9x8x8xf32, #tpu.memory_space<vmem>>, vector<1x8x8xf32>
    %173 = vector.shape_cast %172 : vector<1x8x8xf32> to vector<8x8xf32>
    %cst_112 = arith.constant dense<0.000000e+00> : vector<8x128xf32>
    %174 = tpu.matmul %173, %171, %cst_112 {dimension_numbers = #tpu.dot_dimension_numbers<[1], [0], [0], [1], [0, 0, 1, 1], [], []>} : vector<8x8xf32>, vector<8x128xf32>, vector<8x128xf32> -> vector<8x128xf32>
    %c9_i32_113 = arith.constant 9 : i32
    %175 = tpu.dynamic_rotate %171 by %c9_i32_113 dim 1 : vector<8x128xf32>, i32 -> vector<8x128xf32>
    %176 = vector.broadcast %6 : vector<1x128xf32> to vector<8x128xf32>
    %177 = arith.mulf %175, %176 : vector<8x128xf32>
    %c0_114 = arith.constant 0 : index
    %c0_115 = arith.constant 0 : index
    %c0_116 = arith.constant 0 : index
    %178 = vector.load %arg6[%c0_114, %c0_115, %c0_116] : memref<9x8x8xf32, #tpu.memory_space<vmem>>, vector<1x8x8xf32>
    %179 = vector.shape_cast %178 : vector<1x8x8xf32> to vector<8x8xf32>
    %cst_117 = arith.constant dense<0.000000e+00> : vector<8x128xf32>
    %180 = tpu.matmul %179, %177, %cst_117 {dimension_numbers = #tpu.dot_dimension_numbers<[1], [0], [0], [1], [0, 0, 1, 1], [], []>} : vector<8x8xf32>, vector<8x128xf32>, vector<8x128xf32> -> vector<8x128xf32>
    %181 = arith.addf %174, %180 : vector<8x128xf32>
    %c8_i32_118 = arith.constant 8 : i32
    %182 = tpu.dynamic_rotate %171 by %c8_i32_118 dim 1 : vector<8x128xf32>, i32 -> vector<8x128xf32>
    %183 = vector.broadcast %7 : vector<1x128xf32> to vector<8x128xf32>
    %184 = arith.mulf %182, %183 : vector<8x128xf32>
    %c1_119 = arith.constant 1 : index
    %c0_120 = arith.constant 0 : index
    %c0_121 = arith.constant 0 : index
    %185 = vector.load %arg6[%c1_119, %c0_120, %c0_121] : memref<9x8x8xf32, #tpu.memory_space<vmem>>, vector<1x8x8xf32>
    %186 = vector.shape_cast %185 : vector<1x8x8xf32> to vector<8x8xf32>
    %cst_122 = arith.constant dense<0.000000e+00> : vector<8x128xf32>
    %187 = tpu.matmul %186, %184, %cst_122 {dimension_numbers = #tpu.dot_dimension_numbers<[1], [0], [0], [1], [0, 0, 1, 1], [], []>} : vector<8x8xf32>, vector<8x128xf32>, vector<8x128xf32> -> vector<8x128xf32>
    %188 = arith.addf %181, %187 : vector<8x128xf32>
    %c7_i32_123 = arith.constant 7 : i32
    %189 = tpu.dynamic_rotate %171 by %c7_i32_123 dim 1 : vector<8x128xf32>, i32 -> vector<8x128xf32>
    %190 = vector.broadcast %8 : vector<1x128xf32> to vector<8x128xf32>
    %191 = arith.mulf %189, %190 : vector<8x128xf32>
    %c2_124 = arith.constant 2 : index
    %c0_125 = arith.constant 0 : index
    %c0_126 = arith.constant 0 : index
    %192 = vector.load %arg6[%c2_124, %c0_125, %c0_126] : memref<9x8x8xf32, #tpu.memory_space<vmem>>, vector<1x8x8xf32>
    %193 = vector.shape_cast %192 : vector<1x8x8xf32> to vector<8x8xf32>
    %cst_127 = arith.constant dense<0.000000e+00> : vector<8x128xf32>
    %194 = tpu.matmul %193, %191, %cst_127 {dimension_numbers = #tpu.dot_dimension_numbers<[1], [0], [0], [1], [0, 0, 1, 1], [], []>} : vector<8x8xf32>, vector<8x128xf32>, vector<8x128xf32> -> vector<8x128xf32>
    %195 = arith.addf %188, %194 : vector<8x128xf32>
    %c1_i32_128 = arith.constant 1 : i32
    %196 = tpu.dynamic_rotate %171 by %c1_i32_128 dim 1 : vector<8x128xf32>, i32 -> vector<8x128xf32>
    %197 = vector.broadcast %9 : vector<1x128xf32> to vector<8x128xf32>
    %198 = arith.mulf %196, %197 : vector<8x128xf32>
    %c3_129 = arith.constant 3 : index
    %c0_130 = arith.constant 0 : index
    %c0_131 = arith.constant 0 : index
    %199 = vector.load %arg6[%c3_129, %c0_130, %c0_131] : memref<9x8x8xf32, #tpu.memory_space<vmem>>, vector<1x8x8xf32>
    %200 = vector.shape_cast %199 : vector<1x8x8xf32> to vector<8x8xf32>
    %cst_132 = arith.constant dense<0.000000e+00> : vector<8x128xf32>
    %201 = tpu.matmul %200, %198, %cst_132 {dimension_numbers = #tpu.dot_dimension_numbers<[1], [0], [0], [1], [0, 0, 1, 1], [], []>} : vector<8x8xf32>, vector<8x128xf32>, vector<8x128xf32> -> vector<8x128xf32>
    %202 = arith.addf %195, %201 : vector<8x128xf32>
    %c127_i32_133 = arith.constant 127 : i32
    %203 = tpu.dynamic_rotate %171 by %c127_i32_133 dim 1 : vector<8x128xf32>, i32 -> vector<8x128xf32>
    %204 = vector.broadcast %10 : vector<1x128xf32> to vector<8x128xf32>
    %205 = arith.mulf %203, %204 : vector<8x128xf32>
    %c5_134 = arith.constant 5 : index
    %c0_135 = arith.constant 0 : index
    %c0_136 = arith.constant 0 : index
    %206 = vector.load %arg6[%c5_134, %c0_135, %c0_136] : memref<9x8x8xf32, #tpu.memory_space<vmem>>, vector<1x8x8xf32>
    %207 = vector.shape_cast %206 : vector<1x8x8xf32> to vector<8x8xf32>
    %cst_137 = arith.constant dense<0.000000e+00> : vector<8x128xf32>
    %208 = tpu.matmul %207, %205, %cst_137 {dimension_numbers = #tpu.dot_dimension_numbers<[1], [0], [0], [1], [0, 0, 1, 1], [], []>} : vector<8x8xf32>, vector<8x128xf32>, vector<8x128xf32> -> vector<8x128xf32>
    %209 = arith.addf %202, %208 : vector<8x128xf32>
    %c121_i32_138 = arith.constant 121 : i32
    %210 = tpu.dynamic_rotate %171 by %c121_i32_138 dim 1 : vector<8x128xf32>, i32 -> vector<8x128xf32>
    %211 = vector.broadcast %11 : vector<1x128xf32> to vector<8x128xf32>
    %212 = arith.mulf %210, %211 : vector<8x128xf32>
    %c6_139 = arith.constant 6 : index
    %c0_140 = arith.constant 0 : index
    %c0_141 = arith.constant 0 : index
    %213 = vector.load %arg6[%c6_139, %c0_140, %c0_141] : memref<9x8x8xf32, #tpu.memory_space<vmem>>, vector<1x8x8xf32>
    %214 = vector.shape_cast %213 : vector<1x8x8xf32> to vector<8x8xf32>
    %cst_142 = arith.constant dense<0.000000e+00> : vector<8x128xf32>
    %215 = tpu.matmul %214, %212, %cst_142 {dimension_numbers = #tpu.dot_dimension_numbers<[1], [0], [0], [1], [0, 0, 1, 1], [], []>} : vector<8x8xf32>, vector<8x128xf32>, vector<8x128xf32> -> vector<8x128xf32>
    %216 = arith.addf %209, %215 : vector<8x128xf32>
    %c120_i32_143 = arith.constant 120 : i32
    %217 = tpu.dynamic_rotate %171 by %c120_i32_143 dim 1 : vector<8x128xf32>, i32 -> vector<8x128xf32>
    %218 = vector.broadcast %12 : vector<1x128xf32> to vector<8x128xf32>
    %219 = arith.mulf %217, %218 : vector<8x128xf32>
    %c7_144 = arith.constant 7 : index
    %c0_145 = arith.constant 0 : index
    %c0_146 = arith.constant 0 : index
    %220 = vector.load %arg6[%c7_144, %c0_145, %c0_146] : memref<9x8x8xf32, #tpu.memory_space<vmem>>, vector<1x8x8xf32>
    %221 = vector.shape_cast %220 : vector<1x8x8xf32> to vector<8x8xf32>
    %cst_147 = arith.constant dense<0.000000e+00> : vector<8x128xf32>
    %222 = tpu.matmul %221, %219, %cst_147 {dimension_numbers = #tpu.dot_dimension_numbers<[1], [0], [0], [1], [0, 0, 1, 1], [], []>} : vector<8x8xf32>, vector<8x128xf32>, vector<8x128xf32> -> vector<8x128xf32>
    %223 = arith.addf %216, %222 : vector<8x128xf32>
    %c119_i32_148 = arith.constant 119 : i32
    %224 = tpu.dynamic_rotate %171 by %c119_i32_148 dim 1 : vector<8x128xf32>, i32 -> vector<8x128xf32>
    %225 = vector.broadcast %13 : vector<1x128xf32> to vector<8x128xf32>
    %226 = arith.mulf %224, %225 : vector<8x128xf32>
    %c8_149 = arith.constant 8 : index
    %c0_150 = arith.constant 0 : index
    %c0_151 = arith.constant 0 : index
    %227 = vector.load %arg6[%c8_149, %c0_150, %c0_151] : memref<9x8x8xf32, #tpu.memory_space<vmem>>, vector<1x8x8xf32>
    %228 = vector.shape_cast %227 : vector<1x8x8xf32> to vector<8x8xf32>
    %cst_152 = arith.constant dense<0.000000e+00> : vector<8x128xf32>
    %229 = tpu.matmul %228, %226, %cst_152 {dimension_numbers = #tpu.dot_dimension_numbers<[1], [0], [0], [1], [0, 0, 1, 1], [], []>} : vector<8x8xf32>, vector<8x128xf32>, vector<8x128xf32> -> vector<8x128xf32>
    %230 = arith.addf %223, %229 : vector<8x128xf32>
    %231 = arith.addf %230, %108 : vector<8x128xf32>
    %232 = vector.broadcast %3 : vector<8x1xf32> to vector<8x128xf32>
    %233 = arith.mulf %232, %231 : vector<8x128xf32>
    %234 = vector.broadcast %4 : vector<8x1xf32> to vector<8x128xf32>
    %235 = arith.addf %233, %234 : vector<8x128xf32>
    %cst_153 = arith.constant 0.000000e+00 : f32
    %236 = vector.broadcast %cst_153 : f32 to vector<8x128xf32>
    %237 = arith.maximumf %235, %236 : vector<8x128xf32>
    %c0_154 = arith.constant 0 : index
    %c0_155 = arith.constant 0 : index
    %238 = vector.load %arg9[%c0_154, %c0_155] : memref<8x128xf32, #tpu.memory_space<vmem>>, vector<8x128xf32>
    tpu.vector_store %arg9[%c0_154, %c0_155], %237 {strides = array<i32>} : memref<8x128xf32, #tpu.memory_space<vmem>>, vector<8x128xf32>,
    return
  }
  func.func @transform_0(%arg0: i32) -> (i32, i32) {
    %c0_i32 = arith.constant 0 : i32
    %c0_i32_0 = arith.constant 0 : i32
    return %c0_i32, %arg0 : i32, i32
  }
  func.func @transform_1(%arg0: i32) -> (i32, i32, i32) {
    %c0_i32 = arith.constant 0 : i32
    %c0_i32_0 = arith.constant 0 : i32
    %c0_i32_1 = arith.constant 0 : i32
    %c0_i32_2 = arith.constant 0 : i32
    return %c0_i32, %c0_i32_0, %c0_i32_1 : i32, i32, i32
  }
  func.func @transform_2(%arg0: i32) -> (i32, i32) {
    %c0_i32 = arith.constant 0 : i32
    %c0_i32_0 = arith.constant 0 : i32
    %c0_i32_1 = arith.constant 0 : i32
    return %c0_i32, %c0_i32_0 : i32, i32
  }
  func.func @transform_3(%arg0: i32) -> (i32, i32, i32) {
    %c0_i32 = arith.constant 0 : i32
    %c0_i32_0 = arith.constant 0 : i32
    %c0_i32_1 = arith.constant 0 : i32
    %c0_i32_2 = arith.constant 0 : i32
    return %c0_i32, %c0_i32_0, %c0_i32_1 : i32, i32, i32
  }
  func.func @transform_4(%arg0: i32) -> (i32, i32, i32) {
    %c0_i32 = arith.constant 0 : i32
    %c0_i32_0 = arith.constant 0 : i32
    %c0_i32_1 = arith.constant 0 : i32
    %c0_i32_2 = arith.constant 0 : i32
    return %c0_i32, %c0_i32_0, %c0_i32_1 : i32, i32, i32
  }
  func.func @transform_5(%arg0: i32) -> (i32, i32, i32) {
    %c0_i32 = arith.constant 0 : i32
    %c0_i32_0 = arith.constant 0 : i32
    %c0_i32_1 = arith.constant 0 : i32
    %c0_i32_2 = arith.constant 0 : i32
    return %c0_i32, %c0_i32_0, %c0_i32_1 : i32, i32, i32
  }
  func.func @transform_6(%arg0: i32) -> (i32, i32) {
    %c0_i32 = arith.constant 0 : i32
    %c0_i32_0 = arith.constant 0 : i32
    %c0_i32_1 = arith.constant 0 : i32
    return %c0_i32, %c0_i32_0 : i32, i32
  }
  func.func @transform_7(%arg0: i32) -> (i32, i32) {
    %c0_i32 = arith.constant 0 : i32
    %c0_i32_0 = arith.constant 0 : i32
    %c0_i32_1 = arith.constant 0 : i32
    return %c0_i32, %c0_i32_0 : i32, i32
  }
  func.func @transform_8(%arg0: i32) -> (i32, i32) {
    %c0_i32 = arith.constant 0 : i32
    %c0_i32_0 = arith.constant 0 : i32
    return %c0_i32, %arg0 : i32, i32
  }
}

</mosaic_0001>

<llo_original>
// kernel: resnet_forward.1
$region0: #{resnet_forward.1}
  #allocation0 [shape = 'u32[]', space=smem, size = 0x4, offset = 0x4, fixed_abs, tag = 'smem constant byte address 0x4 - core index']
  #allocation1 [shape = 'u32[72,128]{1,0:T(1,128)}', space=vmem, size = 0x9000, scoped, tag = 'internal scratch']
  %s0 = inlined_call_operand.vmem [shape: f32[16,128], index: 0, kind: input, shape index: {}]
  %s1 = inlined_call_operand.vmem [shape: f32[4,8,16], index: 1, kind: input, shape index: {}]
  %s2 = inlined_call_operand.vmem [shape: f32[8,16], index: 2, kind: input, shape index: {}]
  %s3 = inlined_call_operand.vmem [shape: f32[9,8,8], index: 3, kind: input, shape index: {}]
  %s4 = inlined_call_operand.vmem [shape: f32[9,8,8], index: 4, kind: input, shape index: {}]
  %s5 = inlined_call_operand.vmem [shape: f32[9,8,8], index: 5, kind: input, shape index: {}]
  %s6 = inlined_call_operand.vmem [shape: f32[8,5], index: 6, kind: input, shape index: {}]
  %s7 = inlined_call_operand.vmem [shape: f32[9,128], index: 7, kind: input, shape index: {}]
  %s8 = inlined_call_operand.vmem [shape: f32[8,128], index: 8, kind: output, shape index: {}]
  %s9 = sld [smem:[#allocation0]]
  $region42: #{resnet_forward.1} parent=0
    _
  %s11 = ssub.s32 1, %s9
  %s12 = scalar_select 0, %s11, %s9
  // Predicated region
  $region2: #{resnet_forward.1} parent=0 // pred_check
    _
  $region3: #{resnet_forward.1} parent=0 // pred_check_branch
    %14 = sbr.rel (0) target = $region5
  $region4: #{resnet_forward.1} parent=0 // pred_region
    _
  $region5: #{resnet_forward.1} parent=0 // pred_fallthru
    _
  // Predicated region
  $region6: #{resnet_forward.1} parent=0 // pred_check
    _
  $region7: #{resnet_forward.1} parent=0 // pred_check_branch
    %16 = sbr.rel (0) target = $region9
  $region8: #{resnet_forward.1} parent=0 // pred_region
    _
  $region9: #{resnet_forward.1} parent=0 // pred_fallthru
    _
  // Predicated region
  $region10: #{resnet_forward.1} parent=0 // pred_check
    _
  $region11: #{resnet_forward.1} parent=0 // pred_check_branch
    %18 = sbr.rel (0) target = $region13
  $region12: #{resnet_forward.1} parent=0 // pred_region
    _
  $region13: #{resnet_forward.1} parent=0 // pred_fallthru
    _
  // Predicated region
  $region14: #{resnet_forward.1} parent=0 // pred_check
    _
  $region15: #{resnet_forward.1} parent=0 // pred_check_branch
    %20 = sbr.rel (0) target = $region17
  $region16: #{resnet_forward.1} parent=0 // pred_region
    _
  $region17: #{resnet_forward.1} parent=0 // pred_fallthru
    _
  // Predicated region
  $region18: #{resnet_forward.1} parent=0 // pred_check
    _
  $region19: #{resnet_forward.1} parent=0 // pred_check_branch
    %22 = sbr.rel (0) target = $region21
  $region20: #{resnet_forward.1} parent=0 // pred_region
    _
  $region21: #{resnet_forward.1} parent=0 // pred_fallthru
    _
  // Predicated region
  $region22: #{resnet_forward.1} parent=0 // pred_check
    _
  $region23: #{resnet_forward.1} parent=0 // pred_check_branch
    %24 = sbr.rel (0) target = $region25
  $region24: #{resnet_forward.1} parent=0 // pred_region
    _
  $region25: #{resnet_forward.1} parent=0 // pred_fallthru
    _
  // Predicated region
  $region26: #{resnet_forward.1} parent=0 // pred_check
    _
  $region27: #{resnet_forward.1} parent=0 // pred_check_branch
    %26 = sbr.rel (0) target = $region29
  $region28: #{resnet_forward.1} parent=0 // pred_region
    _
  $region29: #{resnet_forward.1} parent=0 // pred_fallthru
    _
  // Predicated region
  $region30: #{resnet_forward.1} parent=0 // pred_check
    _
  $region31: #{resnet_forward.1} parent=0 // pred_check_branch
    %28 = sbr.rel (0) target = $region33
  $region32: #{resnet_forward.1} parent=0 // pred_region
    _
  $region33: #{resnet_forward.1} parent=0 // pred_fallthru
    _
  %v29 = vld [vmem:[%s6] sm:$0xff]
  %v30 = vld [vmem:[%s7] sm:$0xff]
  %v31 = vld [vmem:[%s7 + $0x8] sm:$0x1]
  %v32 = vld [vmem:[%s0] sm:$0xff]
  %v33 = vld [vmem:[%s0 + $0x8] sm:$0xff]
  %v34 = vld [vmem:[%s1] sm:$0xff]
  %35 = vrot.lane.b32.xlu0 %v32, 1
  %v36 = vpop.permute.xlu0 %35
  %37 = vrot.lane.b32.xlu0 %v33, 1
  %v38 = vpop.permute.xlu0 %37
  %v39 = vperm.slane %v30, 3
  %v40 = vmul.f32 %v36, %v39
  %v41 = vmul.f32 %v38, %v39
  %s42 = scalar_lea.vmem %s1, 8
  %v43 = vld [vmem:[%s42] sm:$0xff]
  %vm44 = vcmask 130048
  %v46 = vsel %vm44, %v43, 0
  %48 = vmatpush.msra.mxu0 0.0
  %49 = vmatpush.msra.mxu0 0.0
  %50 = vmatpush.msra.mxu0 0.0
  %51 = vmatpush.msra.mxu0 0.0
  %52 = vmatpush.msra.mxu0 0.0
  %53 = vmatpush.msra.mxu0 0.0
  %54 = vmatpush.msra.mxu0 0.0
  %55 = vmatpush.msra.mxu0 0.0
  %56 = vmatpush.msra.mxu0 0.0
  %57 = vmatpush.msra.mxu0 0.0
  %58 = vmatpush.msra.mxu0 0.0
  %59 = vmatpush.msra.mxu0 0.0
  %60 = vmatpush.msra.mxu0 0.0
  %61 = vmatpush.msra.mxu0 0.0
  %62 = vmatpush.msra.mxu0 %v41
  %63 = vmatpush.msra.mxu0 %v40
  %64 = vmatmul.f32.gmra.mxu0 %v46
  %v65 = vpop.f32.mrf.mxu0
  %v66 = vadd.f32 0.0, %v65
  %67 = vdwg.mxu0
  %v69 = vsel %vm44, %v34, 0
  %71 = vmatpush.msra.mxu0 0.0
  %72 = vmatpush.msra.mxu0 0.0
  %73 = vmatpush.msra.mxu0 0.0
  %74 = vmatpush.msra.mxu0 0.0
  %75 = vmatpush.msra.mxu0 0.0
  %76 = vmatpush.msra.mxu0 0.0
  %77 = vmatpush.msra.mxu0 0.0
  %78 = vmatpush.msra.mxu0 0.0
  %79 = vmatpush.msra.mxu0 0.0
  %80 = vmatpush.msra.mxu0 0.0
  %81 = vmatpush.msra.mxu0 0.0
  %82 = vmatpush.msra.mxu0 0.0
  %83 = vmatpush.msra.mxu0 0.0
  %84 = vmatpush.msra.mxu0 0.0
  %85 = vmatpush.msra.mxu0 %v33
  %86 = vmatpush.msra.mxu0 %v32
  %87 = vmatmul.f32.gmra.mxu0 %v69
  %v88 = vpop.f32.mrf.mxu0
  %v89 = vadd.f32 %v66, %v88
  %90 = vdwg.mxu0
  %91 = vrot.lane.b32.xlu0 %v32, 8
  %v92 = vpop.permute.xlu0 %91
  %93 = vrot.lane.b32.xlu0 %v33, 8
  %v94 = vpop.permute.xlu0 %93
  %v95 = vperm.slane %v30, 1
  %v96 = vmul.f32 %v92, %v95
  %v97 = vmul.f32 %v94, %v95
  %s98 = scalar_lea.vmem %s1, 16
  %v99 = vld [vmem:[%s98] sm:$0xff]
  %v101 = vsel %vm44, %v99, 0
  %103 = vmatpush.msra.mxu0 0.0
  %104 = vmatpush.msra.mxu0 0.0
  %105 = vmatpush.msra.mxu0 0.0
  %106 = vmatpush.msra.mxu0 0.0
  %107 = vmatpush.msra.mxu0 0.0
  %108 = vmatpush.msra.mxu0 0.0
  %109 = vmatpush.msra.mxu0 0.0
  %110 = vmatpush.msra.mxu0 0.0
  %111 = vmatpush.msra.mxu0 0.0
  %112 = vmatpush.msra.mxu0 0.0
  %113 = vmatpush.msra.mxu0 0.0
  %114 = vmatpush.msra.mxu0 0.0
  %115 = vmatpush.msra.mxu0 0.0
  %116 = vmatpush.msra.mxu0 0.0
  %117 = vmatpush.msra.mxu0 %v97
  %118 = vmatpush.msra.mxu0 %v96
  %119 = vmatmul.f32.gmra.mxu0 %v101
  %v120 = vpop.f32.mrf.mxu0
  %v121 = vadd.f32 0.0, %v120
  %122 = vdwg.mxu0
  %v123 = vadd.f32 %v89, %v121
  %124 = vrot.lane.b32.xlu0 %v32, 9
  %v125 = vpop.permute.xlu0 %124
  %126 = vrot.lane.b32.xlu0 %v33, 9
  %v127 = vpop.permute.xlu0 %126
  %v128 = vperm.slane %v30, 0
  %v129 = vmul.f32 %v125, %v128
  %v130 = vmul.f32 %v127, %v128
  %s131 = scalar_lea.vmem %s1, 24
  %v132 = vld [vmem:[%s131] sm:$0xff]
  %v134 = vsel %vm44, %v132, 0
  %136 = vmatpush.msra.mxu0 0.0
  %137 = vmatpush.msra.mxu0 0.0
  %138 = vmatpush.msra.mxu0 0.0
  %139 = vmatpush.msra.mxu0 0.0
  %140 = vmatpush.msra.mxu0 0.0
  %141 = vmatpush.msra.mxu0 0.0
  %142 = vmatpush.msra.mxu0 0.0
  %143 = vmatpush.msra.mxu0 0.0
  %144 = vmatpush.msra.mxu0 0.0
  %145 = vmatpush.msra.mxu0 0.0
  %146 = vmatpush.msra.mxu0 0.0
  %147 = vmatpush.msra.mxu0 0.0
  %148 = vmatpush.msra.mxu0 0.0
  %149 = vmatpush.msra.mxu0 0.0
  %150 = vmatpush.msra.mxu0 %v130
  %151 = vmatpush.msra.mxu0 %v129
  %152 = vmatmul.f32.gmra.mxu0 %v134
  %v153 = vpop.f32.mrf.mxu0
  %v154 = vadd.f32 0.0, %v153
  %155 = vdwg.mxu0
  %v156 = vadd.f32 %v123, %v154
  %158 = vset.pattern.permute.xlu0 0
  %159 = vperm.xlu0 %158, %v29
  %v160 = vpop.permute.xlu0 %159
  %v162 = vadd.f32 %v156, %v160
  %v163 = vmax.f32 %v162, 0.0
  %v164 = vld [vmem:[%s2] sm:$0xff]
  %v166 = vsel %vm44, %v164, 0
  %168 = vmatpush.msra.mxu0 0.0
  %169 = vmatpush.msra.mxu0 0.0
  %170 = vmatpush.msra.mxu0 0.0
  %171 = vmatpush.msra.mxu0 0.0
  %172 = vmatpush.msra.mxu0 0.0
  %173 = vmatpush.msra.mxu0 0.0
  %174 = vmatpush.msra.mxu0 0.0
  %175 = vmatpush.msra.mxu0 0.0
  %176 = vmatpush.msra.mxu0 0.0
  %177 = vmatpush.msra.mxu0 0.0
  %178 = vmatpush.msra.mxu0 0.0
  %179 = vmatpush.msra.mxu0 0.0
  %180 = vmatpush.msra.mxu0 0.0
  %181 = vmatpush.msra.mxu0 0.0
  %182 = vmatpush.msra.mxu0 %v33
  %183 = vmatpush.msra.mxu0 %v32
  %184 = vmatmul.f32.gmra.mxu0 %v166
  %v185 = vpop.f32.mrf.mxu0
  %v186 = vadd.f32 0.0, %v185
  %187 = vdwg.mxu0
  %s188 = scalar_lea.vmem %s3, 32
  %v189 = vld [vmem:[%s188] sm:$0xff]
  %190 = vrot.lane.b32.xlu0 %v163, 9
  %v191 = vpop.permute.xlu0 %190
  %v192 = vmul.f32 %v191, %v128
  %v193 = vld [vmem:[%s3] sm:$0xff]
  %vm194 = vcmask 64512
  %v196 = vsel %vm194, %v193, 0
  %198 = vmatpush.msra.mxu0 0.0
  %199 = vmatpush.msra.mxu0 0.0
  %200 = vmatpush.msra.mxu0 0.0
  %201 = vmatpush.msra.mxu0 0.0
  %202 = vmatpush.msra.mxu0 0.0
  %203 = vmatpush.msra.mxu0 0.0
  %204 = vmatpush.msra.mxu0 0.0
  %205 = vmatpush.msra.mxu0 0.0
  %206 = vmatpush.msra.mxu0 0.0
  %207 = vmatpush.msra.mxu0 0.0
  %208 = vmatpush.msra.mxu0 0.0
  %209 = vmatpush.msra.mxu0 0.0
  %210 = vmatpush.msra.mxu0 0.0
  %211 = vmatpush.msra.mxu0 0.0
  %212 = vmatpush.msra.mxu0 0.0
  %213 = vmatpush.msra.mxu0 %v192
  %214 = vmatmul.f32.gmra.mxu0 %v196
  %v215 = vpop.f32.mrf.mxu0
  %v216 = vadd.f32 0.0, %v215
  %217 = vdwg.mxu0
  %v219 = vsel %vm194, %v189, 0
  %221 = vmatpush.msra.mxu0 0.0
  %222 = vmatpush.msra.mxu0 0.0
  %223 = vmatpush.msra.mxu0 0.0
  %224 = vmatpush.msra.mxu0 0.0
  %225 = vmatpush.msra.mxu0 0.0
  %226 = vmatpush.msra.mxu0 0.0
  %227 = vmatpush.msra.mxu0 0.0
  %228 = vmatpush.msra.mxu0 0.0
  %229 = vmatpush.msra.mxu0 0.0
  %230 = vmatpush.msra.mxu0 0.0
  %231 = vmatpush.msra.mxu0 0.0
  %232 = vmatpush.msra.mxu0 0.0
  %233 = vmatpush.msra.mxu0 0.0
  %234 = vmatpush.msra.mxu0 0.0
  %235 = vmatpush.msra.mxu0 0.0
  %236 = vmatpush.msra.mxu0 %v163
  %237 = vmatmul.f32.gmra.mxu0 %v219
  %v238 = vpop.f32.mrf.mxu0
  %v239 = vadd.f32 %v216, %v238
  %240 = vdwg.mxu0
  %241 = vrot.lane.b32.xlu0 %v163, 8
  %v242 = vpop.permute.xlu0 %241
  %v243 = vmul.f32 %v242, %v95
  %s244 = scalar_lea.vmem %s3, 8
  %v245 = vld [vmem:[%s244] sm:$0xff]
  %v247 = vsel %vm194, %v245, 0
  %249 = vmatpush.msra.mxu0 0.0
  %250 = vmatpush.msra.mxu0 0.0
  %251 = vmatpush.msra.mxu0 0.0
  %252 = vmatpush.msra.mxu0 0.0
  %253 = vmatpush.msra.mxu0 0.0
  %254 = vmatpush.msra.mxu0 0.0
  %255 = vmatpush.msra.mxu0 0.0
  %256 = vmatpush.msra.mxu0 0.0
  %257 = vmatpush.msra.mxu0 0.0
  %258 = vmatpush.msra.mxu0 0.0
  %259 = vmatpush.msra.mxu0 0.0
  %260 = vmatpush.msra.mxu0 0.0
  %261 = vmatpush.msra.mxu0 0.0
  %262 = vmatpush.msra.mxu0 0.0
  %263 = vmatpush.msra.mxu0 0.0
  %264 = vmatpush.msra.mxu0 %v243
  %265 = vmatmul.f32.gmra.mxu0 %v247
  %v266 = vpop.f32.mrf.mxu0
  %v267 = vadd.f32 0.0, %v266
  %268 = vdwg.mxu0
  %v269 = vadd.f32 %v239, %v267
  %270 = vrot.lane.b32.xlu0 %v163, 7
  %v271 = vpop.permute.xlu0 %270
  %v272 = vperm.slane %v30, 2
  %v273 = vmul.f32 %v271, %v272
  %s274 = scalar_lea.vmem %s3, 16
  %v275 = vld [vmem:[%s274] sm:$0xff]
  %v277 = vsel %vm194, %v275, 0
  %279 = vmatpush.msra.mxu0 0.0
  %280 = vmatpush.msra.mxu0 0.0
  %281 = vmatpush.msra.mxu0 0.0
  %282 = vmatpush.msra.mxu0 0.0
  %283 = vmatpush.msra.mxu0 0.0
  %284 = vmatpush.msra.mxu0 0.0
  %285 = vmatpush.msra.mxu0 0.0
  %286 = vmatpush.msra.mxu0 0.0
  %287 = vmatpush.msra.mxu0 0.0
  %288 = vmatpush.msra.mxu0 0.0
  %289 = vmatpush.msra.mxu0 0.0
  %290 = vmatpush.msra.mxu0 0.0
  %291 = vmatpush.msra.mxu0 0.0
  %292 = vmatpush.msra.mxu0 0.0
  %293 = vmatpush.msra.mxu0 0.0
  %294 = vmatpush.msra.mxu0 %v273
  %295 = vmatmul.f32.gmra.mxu0 %v277
  %v296 = vpop.f32.mrf.mxu0
  %v297 = vadd.f32 0.0, %v296
  %298 = vdwg.mxu0
  %v299 = vadd.f32 %v269, %v297
  %300 = vrot.lane.b32.xlu0 %v163, 1
  %v301 = vpop.permute.xlu0 %300
  %v302 = vmul.f32 %v301, %v39
  %s303 = scalar_lea.vmem %s3, 24
  %v304 = vld [vmem:[%s303] sm:$0xff]
  %v306 = vsel %vm194, %v304, 0
  %308 = vmatpush.msra.mxu0 0.0
  %309 = vmatpush.msra.mxu0 0.0
  %310 = vmatpush.msra.mxu0 0.0
  %311 = vmatpush.msra.mxu0 0.0
  %312 = vmatpush.msra.mxu0 0.0
  %313 = vmatpush.msra.mxu0 0.0
  %314 = vmatpush.msra.mxu0 0.0
  %315 = vmatpush.msra.mxu0 0.0
  %316 = vmatpush.msra.mxu0 0.0
  %317 = vmatpush.msra.mxu0 0.0
  %318 = vmatpush.msra.mxu0 0.0
  %319 = vmatpush.msra.mxu0 0.0
  %320 = vmatpush.msra.mxu0 0.0
  %321 = vmatpush.msra.mxu0 0.0
  %322 = vmatpush.msra.mxu0 0.0
  %323 = vmatpush.msra.mxu0 %v302
  %324 = vmatmul.f32.gmra.mxu0 %v306
  %v325 = vpop.f32.mrf.mxu0
  %v326 = vadd.f32 0.0, %v325
  %327 = vdwg.mxu0
  %v328 = vadd.f32 %v299, %v326
  %329 = vrot.lane.b32.xlu0 %v163, 127
  %v330 = vpop.permute.xlu0 %329
  %v331 = vperm.slane %v30, 5
  %v332 = vmul.f32 %v330, %v331
  %s333 = scalar_lea.vmem %s3, 40
  %v334 = vld [vmem:[%s333] sm:$0xff]
  %v336 = vsel %vm194, %v334, 0
  %338 = vmatpush.msra.mxu0 0.0
  %339 = vmatpush.msra.mxu0 0.0
  %340 = vmatpush.msra.mxu0 0.0
  %341 = vmatpush.msra.mxu0 0.0
  %342 = vmatpush.msra.mxu0 0.0
  %343 = vmatpush.msra.mxu0 0.0
  %344 = vmatpush.msra.mxu0 0.0
  %345 = vmatpush.msra.mxu0 0.0
  %346 = vmatpush.msra.mxu0 0.0
  %347 = vmatpush.msra.mxu0 0.0
  %348 = vmatpush.msra.mxu0 0.0
  %349 = vmatpush.msra.mxu0 0.0
  %350 = vmatpush.msra.mxu0 0.0
  %351 = vmatpush.msra.mxu0 0.0
  %352 = vmatpush.msra.mxu0 0.0
  %353 = vmatpush.msra.mxu0 %v332
  %354 = vmatmul.f32.gmra.mxu0 %v336
  %v355 = vpop.f32.mrf.mxu0
  %v356 = vadd.f32 0.0, %v355
  %357 = vdwg.mxu0
  %v358 = vadd.f32 %v328, %v356
  %359 = vrot.lane.b32.xlu0 %v163, 121
  %v360 = vpop.permute.xlu0 %359
  %v361 = vperm.slane %v30, 6
  %v362 = vmul.f32 %v360, %v361
  %s363 = scalar_lea.vmem %s3, 48
  %v364 = vld [vmem:[%s363] sm:$0xff]
  %v366 = vsel %vm194, %v364, 0
  %368 = vmatpush.msra.mxu0 0.0
  %369 = vmatpush.msra.mxu0 0.0
  %370 = vmatpush.msra.mxu0 0.0
  %371 = vmatpush.msra.mxu0 0.0
  %372 = vmatpush.msra.mxu0 0.0
  %373 = vmatpush.msra.mxu0 0.0
  %374 = vmatpush.msra.mxu0 0.0
  %375 = vmatpush.msra.mxu0 0.0
  %376 = vmatpush.msra.mxu0 0.0
  %377 = vmatpush.msra.mxu0 0.0
  %378 = vmatpush.msra.mxu0 0.0
  %379 = vmatpush.msra.mxu0 0.0
  %380 = vmatpush.msra.mxu0 0.0
  %381 = vmatpush.msra.mxu0 0.0
  %382 = vmatpush.msra.mxu0 0.0
  %383 = vmatpush.msra.mxu0 %v362
  %384 = vmatmul.f32.gmra.mxu0 %v366
  %v385 = vpop.f32.mrf.mxu0
  %v386 = vadd.f32 0.0, %v385
  %387 = vdwg.mxu0
  %v388 = vadd.f32 %v358, %v386
  %389 = vrot.lane.b32.xlu0 %v163, 120
  %v390 = vpop.permute.xlu0 %389
  %v391 = vperm.slane %v30, 7
  %v392 = vmul.f32 %v390, %v391
  %s393 = scalar_lea.vmem %s3, 56
  %v394 = vld [vmem:[%s393] sm:$0xff]
  %v396 = vsel %vm194, %v394, 0
  %398 = vmatpush.msra.mxu0 0.0
  %399 = vmatpush.msra.mxu0 0.0
  %400 = vmatpush.msra.mxu0 0.0
  %401 = vmatpush.msra.mxu0 0.0
  %402 = vmatpush.msra.mxu0 0.0
  %403 = vmatpush.msra.mxu0 0.0
  %404 = vmatpush.msra.mxu0 0.0
  %405 = vmatpush.msra.mxu0 0.0
  %406 = vmatpush.msra.mxu0 0.0
  %407 = vmatpush.msra.mxu0 0.0
  %408 = vmatpush.msra.mxu0 0.0
  %409 = vmatpush.msra.mxu0 0.0
  %410 = vmatpush.msra.mxu0 0.0
  %411 = vmatpush.msra.mxu0 0.0
  %412 = vmatpush.msra.mxu0 0.0
  %413 = vmatpush.msra.mxu0 %v392
  %414 = vmatmul.f32.gmra.mxu0 %v396
  %v415 = vpop.f32.mrf.mxu0
  %v416 = vadd.f32 0.0, %v415
  %417 = vdwg.mxu0
  %v418 = vadd.f32 %v388, %v416
  %419 = vrot.lane.b32.xlu0 %v163, 119
  %v420 = vpop.permute.xlu0 %419
  %v421 = vperm.slane %v31, 0
  %v422 = vmul.f32 %v420, %v421
  %s423 = scalar_lea.vmem %s3, 64
  %v424 = vld [vmem:[%s423] sm:$0xff]
  %v426 = vsel %vm194, %v424, 0
  %428 = vmatpush.msra.mxu0 0.0
  %429 = vmatpush.msra.mxu0 0.0
  %430 = vmatpush.msra.mxu0 0.0
  %431 = vmatpush.msra.mxu0 0.0
  %432 = vmatpush.msra.mxu0 0.0
  %433 = vmatpush.msra.mxu0 0.0
  %434 = vmatpush.msra.mxu0 0.0
  %435 = vmatpush.msra.mxu0 0.0
  %436 = vmatpush.msra.mxu0 0.0
  %437 = vmatpush.msra.mxu0 0.0
  %438 = vmatpush.msra.mxu0 0.0
  %439 = vmatpush.msra.mxu0 0.0
  %440 = vmatpush.msra.mxu0 0.0
  %441 = vmatpush.msra.mxu0 0.0
  %442 = vmatpush.msra.mxu0 0.0
  %443 = vmatpush.msra.mxu0 %v422
  %444 = vmatmul.f32.gmra.mxu0 %v426
  %v445 = vpop.f32.mrf.mxu0
  %v446 = vadd.f32 0.0, %v445
  %447 = vdwg.mxu0
  %v448 = vadd.f32 %v418, %v446
  %v449 = vadd.f32 %v448, %v186
  %450 = vset.pattern.permute.xlu0 1
  %451 = vperm.xlu0 %450, %v29
  %v452 = vpop.permute.xlu0 %451
  %v454 = vadd.f32 %v449, %v452
  %v455 = vmax.f32 %v454, 0.0
  %s456 = scalar_lea.vmem %s4, 32
  %v457 = vld [vmem:[%s456] sm:$0xff]
  %458 = vrot.lane.b32.xlu0 %v455, 9
  %v459 = vpop.permute.xlu0 %458
  %v460 = vmul.f32 %v459, %v128
  %v461 = vld [vmem:[%s4] sm:$0xff]
  %v463 = vsel %vm194, %v461, 0
  %465 = vmatpush.msra.mxu0 0.0
  %466 = vmatpush.msra.mxu0 0.0
  %467 = vmatpush.msra.mxu0 0.0
  %468 = vmatpush.msra.mxu0 0.0
  %469 = vmatpush.msra.mxu0 0.0
  %470 = vmatpush.msra.mxu0 0.0
  %471 = vmatpush.msra.mxu0 0.0
  %472 = vmatpush.msra.mxu0 0.0
  %473 = vmatpush.msra.mxu0 0.0
  %474 = vmatpush.msra.mxu0 0.0
  %475 = vmatpush.msra.mxu0 0.0
  %476 = vmatpush.msra.mxu0 0.0
  %477 = vmatpush.msra.mxu0 0.0
  %478 = vmatpush.msra.mxu0 0.0
  %479 = vmatpush.msra.mxu0 0.0
  %480 = vmatpush.msra.mxu0 %v460
  %481 = vmatmul.f32.gmra.mxu0 %v463
  %v482 = vpop.f32.mrf.mxu0
  %v483 = vadd.f32 0.0, %v482
  %484 = vdwg.mxu0
  %v486 = vsel %vm194, %v457, 0
  %488 = vmatpush.msra.mxu0 0.0
  %489 = vmatpush.msra.mxu0 0.0
  %490 = vmatpush.msra.mxu0 0.0
  %491 = vmatpush.msra.mxu0 0.0
  %492 = vmatpush.msra.mxu0 0.0
  %493 = vmatpush.msra.mxu0 0.0
  %494 = vmatpush.msra.mxu0 0.0
  %495 = vmatpush.msra.mxu0 0.0
  %496 = vmatpush.msra.mxu0 0.0
  %497 = vmatpush.msra.mxu0 0.0
  %498 = vmatpush.msra.mxu0 0.0
  %499 = vmatpush.msra.mxu0 0.0
  %500 = vmatpush.msra.mxu0 0.0
  %501 = vmatpush.msra.mxu0 0.0
  %502 = vmatpush.msra.mxu0 0.0
  %503 = vmatpush.msra.mxu0 %v455
  %504 = vmatmul.f32.gmra.mxu0 %v486
  %v505 = vpop.f32.mrf.mxu0
  %v506 = vadd.f32 %v483, %v505
  %507 = vdwg.mxu0
  %508 = vrot.lane.b32.xlu0 %v455, 8
  %v509 = vpop.permute.xlu0 %508
  %v510 = vmul.f32 %v509, %v95
  %s511 = scalar_lea.vmem %s4, 8
  %v512 = vld [vmem:[%s511] sm:$0xff]
  %v514 = vsel %vm194, %v512, 0
  %516 = vmatpush.msra.mxu0 0.0
  %517 = vmatpush.msra.mxu0 0.0
  %518 = vmatpush.msra.mxu0 0.0
  %519 = vmatpush.msra.mxu0 0.0
  %520 = vmatpush.msra.mxu0 0.0
  %521 = vmatpush.msra.mxu0 0.0
  %522 = vmatpush.msra.mxu0 0.0
  %523 = vmatpush.msra.mxu0 0.0
  %524 = vmatpush.msra.mxu0 0.0
  %525 = vmatpush.msra.mxu0 0.0
  %526 = vmatpush.msra.mxu0 0.0
  %527 = vmatpush.msra.mxu0 0.0
  %528 = vmatpush.msra.mxu0 0.0
  %529 = vmatpush.msra.mxu0 0.0
  %530 = vmatpush.msra.mxu0 0.0
  %531 = vmatpush.msra.mxu0 %v510
  %532 = vmatmul.f32.gmra.mxu0 %v514
  %v533 = vpop.f32.mrf.mxu0
  %v534 = vadd.f32 0.0, %v533
  %535 = vdwg.mxu0
  %v536 = vadd.f32 %v506, %v534
  %537 = vrot.lane.b32.xlu0 %v455, 7
  %v538 = vpop.permute.xlu0 %537
  %v539 = vmul.f32 %v538, %v272
  %s540 = scalar_lea.vmem %s4, 16
  %v541 = vld [vmem:[%s540] sm:$0xff]
  %v543 = vsel %vm194, %v541, 0
  %545 = vmatpush.msra.mxu0 0.0
  %546 = vmatpush.msra.mxu0 0.0
  %547 = vmatpush.msra.mxu0 0.0
  %548 = vmatpush.msra.mxu0 0.0
  %549 = vmatpush.msra.mxu0 0.0
  %550 = vmatpush.msra.mxu0 0.0
  %551 = vmatpush.msra.mxu0 0.0
  %552 = vmatpush.msra.mxu0 0.0
  %553 = vmatpush.msra.mxu0 0.0
  %554 = vmatpush.msra.mxu0 0.0
  %555 = vmatpush.msra.mxu0 0.0
  %556 = vmatpush.msra.mxu0 0.0
  %557 = vmatpush.msra.mxu0 0.0
  %558 = vmatpush.msra.mxu0 0.0
  %559 = vmatpush.msra.mxu0 0.0
  %560 = vmatpush.msra.mxu0 %v539
  %561 = vmatmul.f32.gmra.mxu0 %v543
  %v562 = vpop.f32.mrf.mxu0
  %v563 = vadd.f32 0.0, %v562
  %564 = vdwg.mxu0
  %v565 = vadd.f32 %v536, %v563
  %566 = vrot.lane.b32.xlu0 %v455, 1
  %v567 = vpop.permute.xlu0 %566
  %v568 = vmul.f32 %v567, %v39
  %s569 = scalar_lea.vmem %s4, 24
  %v570 = vld [vmem:[%s569] sm:$0xff]
  %v572 = vsel %vm194, %v570, 0
  %574 = vmatpush.msra.mxu0 0.0
  %575 = vmatpush.msra.mxu0 0.0
  %576 = vmatpush.msra.mxu0 0.0
  %577 = vmatpush.msra.mxu0 0.0
  %578 = vmatpush.msra.mxu0 0.0
  %579 = vmatpush.msra.mxu0 0.0
  %580 = vmatpush.msra.mxu0 0.0
  %581 = vmatpush.msra.mxu0 0.0
  %582 = vmatpush.msra.mxu0 0.0
  %583 = vmatpush.msra.mxu0 0.0
  %584 = vmatpush.msra.mxu0 0.0
  %585 = vmatpush.msra.mxu0 0.0
  %586 = vmatpush.msra.mxu0 0.0
  %587 = vmatpush.msra.mxu0 0.0
  %588 = vmatpush.msra.mxu0 0.0
  %589 = vmatpush.msra.mxu0 %v568
  %590 = vmatmul.f32.gmra.mxu0 %v572
  %v591 = vpop.f32.mrf.mxu0
  %v592 = vadd.f32 0.0, %v591
  %593 = vdwg.mxu0
  %v594 = vadd.f32 %v565, %v592
  %595 = vrot.lane.b32.xlu0 %v455, 127
  %v596 = vpop.permute.xlu0 %595
  %v597 = vmul.f32 %v596, %v331
  %s598 = scalar_lea.vmem %s4, 40
  %v599 = vld [vmem:[%s598] sm:$0xff]
  %v601 = vsel %vm194, %v599, 0
  %603 = vmatpush.msra.mxu0 0.0
  %604 = vmatpush.msra.mxu0 0.0
  %605 = vmatpush.msra.mxu0 0.0
  %606 = vmatpush.msra.mxu0 0.0
  %607 = vmatpush.msra.mxu0 0.0
  %608 = vmatpush.msra.mxu0 0.0
  %609 = vmatpush.msra.mxu0 0.0
  %610 = vmatpush.msra.mxu0 0.0
  %611 = vmatpush.msra.mxu0 0.0
  %612 = vmatpush.msra.mxu0 0.0
  %613 = vmatpush.msra.mxu0 0.0
  %614 = vmatpush.msra.mxu0 0.0
  %615 = vmatpush.msra.mxu0 0.0
  %616 = vmatpush.msra.mxu0 0.0
  %617 = vmatpush.msra.mxu0 0.0
  %618 = vmatpush.msra.mxu0 %v597
  %619 = vmatmul.f32.gmra.mxu0 %v601
  %v620 = vpop.f32.mrf.mxu0
  %v621 = vadd.f32 0.0, %v620
  %622 = vdwg.mxu0
  %v623 = vadd.f32 %v594, %v621
  %624 = vrot.lane.b32.xlu0 %v455, 121
  %v625 = vpop.permute.xlu0 %624
  %v626 = vmul.f32 %v625, %v361
  %s627 = scalar_lea.vmem %s4, 48
  %v628 = vld [vmem:[%s627] sm:$0xff]
  %v630 = vsel %vm194, %v628, 0
  %632 = vmatpush.msra.mxu0 0.0
  %633 = vmatpush.msra.mxu0 0.0
  %634 = vmatpush.msra.mxu0 0.0
  %635 = vmatpush.msra.mxu0 0.0
  %636 = vmatpush.msra.mxu0 0.0
  %637 = vmatpush.msra.mxu0 0.0
  %638 = vmatpush.msra.mxu0 0.0
  %639 = vmatpush.msra.mxu0 0.0
  %640 = vmatpush.msra.mxu0 0.0
  %641 = vmatpush.msra.mxu0 0.0
  %642 = vmatpush.msra.mxu0 0.0
  %643 = vmatpush.msra.mxu0 0.0
  %644 = vmatpush.msra.mxu0 0.0
  %645 = vmatpush.msra.mxu0 0.0
  %646 = vmatpush.msra.mxu0 0.0
  %647 = vmatpush.msra.mxu0 %v626
  %648 = vmatmul.f32.gmra.mxu0 %v630
  %v649 = vpop.f32.mrf.mxu0
  %v650 = vadd.f32 0.0, %v649
  %651 = vdwg.mxu0
  %v652 = vadd.f32 %v623, %v650
  %653 = vrot.lane.b32.xlu0 %v455, 120
  %v654 = vpop.permute.xlu0 %653
  %v655 = vmul.f32 %v654, %v391
  %s656 = scalar_lea.vmem %s4, 56
  %v657 = vld [vmem:[%s656] sm:$0xff]
  %v659 = vsel %vm194, %v657, 0
  %661 = vmatpush.msra.mxu0 0.0
  %662 = vmatpush.msra.mxu0 0.0
  %663 = vmatpush.msra.mxu0 0.0
  %664 = vmatpush.msra.mxu0 0.0
  %665 = vmatpush.msra.mxu0 0.0
  %666 = vmatpush.msra.mxu0 0.0
  %667 = vmatpush.msra.mxu0 0.0
  %668 = vmatpush.msra.mxu0 0.0
  %669 = vmatpush.msra.mxu0 0.0
  %670 = vmatpush.msra.mxu0 0.0
  %671 = vmatpush.msra.mxu0 0.0
  %672 = vmatpush.msra.mxu0 0.0
  %673 = vmatpush.msra.mxu0 0.0
  %674 = vmatpush.msra.mxu0 0.0
  %675 = vmatpush.msra.mxu0 0.0
  %676 = vmatpush.msra.mxu0 %v655
  %677 = vmatmul.f32.gmra.mxu0 %v659
  %v678 = vpop.f32.mrf.mxu0
  %v679 = vadd.f32 0.0, %v678
  %680 = vdwg.mxu0
  %v681 = vadd.f32 %v652, %v679
  %682 = vrot.lane.b32.xlu0 %v455, 119
  %v683 = vpop.permute.xlu0 %682
  %v684 = vmul.f32 %v683, %v421
  %s685 = scalar_lea.vmem %s4, 64
  %v686 = vld [vmem:[%s685] sm:$0xff]
  %v688 = vsel %vm194, %v686, 0
  %690 = vmatpush.msra.mxu0 0.0
  %691 = vmatpush.msra.mxu0 0.0
  %692 = vmatpush.msra.mxu0 0.0
  %693 = vmatpush.msra.mxu0 0.0
  %694 = vmatpush.msra.mxu0 0.0
  %695 = vmatpush.msra.mxu0 0.0
  %696 = vmatpush.msra.mxu0 0.0
  %697 = vmatpush.msra.mxu0 0.0
  %698 = vmatpush.msra.mxu0 0.0
  %699 = vmatpush.msra.mxu0 0.0
  %700 = vmatpush.msra.mxu0 0.0
  %701 = vmatpush.msra.mxu0 0.0
  %702 = vmatpush.msra.mxu0 0.0
  %703 = vmatpush.msra.mxu0 0.0
  %704 = vmatpush.msra.mxu0 0.0
  %705 = vmatpush.msra.mxu0 %v684
  %706 = vmatmul.f32.gmra.mxu0 %v688
  %v707 = vpop.f32.mrf.mxu0
  %v708 = vadd.f32 0.0, %v707
  %709 = vdwg.mxu0
  %v710 = vadd.f32 %v681, %v708
  %711 = vset.pattern.permute.xlu0 2
  %712 = vperm.xlu0 %711, %v29
  %v713 = vpop.permute.xlu0 %712
  %v715 = vadd.f32 %v710, %v713
  %v716 = vmax.f32 %v715, 0.0
  %s717 = scalar_lea.vmem %s5, 32
  %v718 = vld [vmem:[%s717] sm:$0xff]
  %719 = vrot.lane.b32.xlu0 %v716, 9
  %v720 = vpop.permute.xlu0 %719
  %v721 = vmul.f32 %v720, %v128
  %v722 = vld [vmem:[%s5] sm:$0xff]
  %v724 = vsel %vm194, %v722, 0
  %726 = vmatpush.msra.mxu0 0.0
  %727 = vmatpush.msra.mxu0 0.0
  %728 = vmatpush.msra.mxu0 0.0
  %729 = vmatpush.msra.mxu0 0.0
  %730 = vmatpush.msra.mxu0 0.0
  %731 = vmatpush.msra.mxu0 0.0
  %732 = vmatpush.msra.mxu0 0.0
  %733 = vmatpush.msra.mxu0 0.0
  %734 = vmatpush.msra.mxu0 0.0
  %735 = vmatpush.msra.mxu0 0.0
  %736 = vmatpush.msra.mxu0 0.0
  %737 = vmatpush.msra.mxu0 0.0
  %738 = vmatpush.msra.mxu0 0.0
  %739 = vmatpush.msra.mxu0 0.0
  %740 = vmatpush.msra.mxu0 0.0
  %741 = vmatpush.msra.mxu0 %v721
  %742 = vmatmul.f32.gmra.mxu0 %v724
  %v743 = vpop.f32.mrf.mxu0
  %v744 = vadd.f32 0.0, %v743
  %745 = vdwg.mxu0
  %v747 = vsel %vm194, %v718, 0
  %749 = vmatpush.msra.mxu0 0.0
  %750 = vmatpush.msra.mxu0 0.0
  %751 = vmatpush.msra.mxu0 0.0
  %752 = vmatpush.msra.mxu0 0.0
  %753 = vmatpush.msra.mxu0 0.0
  %754 = vmatpush.msra.mxu0 0.0
  %755 = vmatpush.msra.mxu0 0.0
  %756 = vmatpush.msra.mxu0 0.0
  %757 = vmatpush.msra.mxu0 0.0
  %758 = vmatpush.msra.mxu0 0.0
  %759 = vmatpush.msra.mxu0 0.0
  %760 = vmatpush.msra.mxu0 0.0
  %761 = vmatpush.msra.mxu0 0.0
  %762 = vmatpush.msra.mxu0 0.0
  %763 = vmatpush.msra.mxu0 0.0
  %764 = vmatpush.msra.mxu0 %v716
  %765 = vmatmul.f32.gmra.mxu0 %v747
  %v766 = vpop.f32.mrf.mxu0
  %v767 = vadd.f32 %v744, %v766
  %768 = vdwg.mxu0
  %769 = vrot.lane.b32.xlu0 %v716, 8
  %v770 = vpop.permute.xlu0 %769
  %v771 = vmul.f32 %v770, %v95
  %s772 = scalar_lea.vmem %s5, 8
  %v773 = vld [vmem:[%s772] sm:$0xff]
  %v775 = vsel %vm194, %v773, 0
  %777 = vmatpush.msra.mxu0 0.0
  %778 = vmatpush.msra.mxu0 0.0
  %779 = vmatpush.msra.mxu0 0.0
  %780 = vmatpush.msra.mxu0 0.0
  %781 = vmatpush.msra.mxu0 0.0
  %782 = vmatpush.msra.mxu0 0.0
  %783 = vmatpush.msra.mxu0 0.0
  %784 = vmatpush.msra.mxu0 0.0
  %785 = vmatpush.msra.mxu0 0.0
  %786 = vmatpush.msra.mxu0 0.0
  %787 = vmatpush.msra.mxu0 0.0
  %788 = vmatpush.msra.mxu0 0.0
  %789 = vmatpush.msra.mxu0 0.0
  %790 = vmatpush.msra.mxu0 0.0
  %791 = vmatpush.msra.mxu0 0.0
  %792 = vmatpush.msra.mxu0 %v771
  %793 = vmatmul.f32.gmra.mxu0 %v775
  %v794 = vpop.f32.mrf.mxu0
  %v795 = vadd.f32 0.0, %v794
  %796 = vdwg.mxu0
  %v797 = vadd.f32 %v767, %v795
  %798 = vrot.lane.b32.xlu0 %v716, 7
  %v799 = vpop.permute.xlu0 %798
  %v800 = vmul.f32 %v799, %v272
  %s801 = scalar_lea.vmem %s5, 16
  %v802 = vld [vmem:[%s801] sm:$0xff]
  %v804 = vsel %vm194, %v802, 0
  %806 = vmatpush.msra.mxu0 0.0
  %807 = vmatpush.msra.mxu0 0.0
  %808 = vmatpush.msra.mxu0 0.0
  %809 = vmatpush.msra.mxu0 0.0
  %810 = vmatpush.msra.mxu0 0.0
  %811 = vmatpush.msra.mxu0 0.0
  %812 = vmatpush.msra.mxu0 0.0
  %813 = vmatpush.msra.mxu0 0.0
  %814 = vmatpush.msra.mxu0 0.0
  %815 = vmatpush.msra.mxu0 0.0
  %816 = vmatpush.msra.mxu0 0.0
  %817 = vmatpush.msra.mxu0 0.0
  %818 = vmatpush.msra.mxu0 0.0
  %819 = vmatpush.msra.mxu0 0.0
  %820 = vmatpush.msra.mxu0 0.0
  %821 = vmatpush.msra.mxu0 %v800
  %822 = vmatmul.f32.gmra.mxu0 %v804
  %v823 = vpop.f32.mrf.mxu0
  %v824 = vadd.f32 0.0, %v823
  %825 = vdwg.mxu0
  %v826 = vadd.f32 %v797, %v824
  %827 = vrot.lane.b32.xlu0 %v716, 1
  %v828 = vpop.permute.xlu0 %827
  %v829 = vmul.f32 %v828, %v39
  %s830 = scalar_lea.vmem %s5, 24
  %v831 = vld [vmem:[%s830] sm:$0xff]
  %v833 = vsel %vm194, %v831, 0
  %835 = vmatpush.msra.mxu0 0.0
  %836 = vmatpush.msra.mxu0 0.0
  %837 = vmatpush.msra.mxu0 0.0
  %838 = vmatpush.msra.mxu0 0.0
  %839 = vmatpush.msra.mxu0 0.0
  %840 = vmatpush.msra.mxu0 0.0
  %841 = vmatpush.msra.mxu0 0.0
  %842 = vmatpush.msra.mxu0 0.0
  %843 = vmatpush.msra.mxu0 0.0
  %844 = vmatpush.msra.mxu0 0.0
  %845 = vmatpush.msra.mxu0 0.0
  %846 = vmatpush.msra.mxu0 0.0
  %847 = vmatpush.msra.mxu0 0.0
  %848 = vmatpush.msra.mxu0 0.0
  %849 = vmatpush.msra.mxu0 0.0
  %850 = vmatpush.msra.mxu0 %v829
  %851 = vmatmul.f32.gmra.mxu0 %v833
  %v852 = vpop.f32.mrf.mxu0
  %v853 = vadd.f32 0.0, %v852
  %854 = vdwg.mxu0
  %v855 = vadd.f32 %v826, %v853
  %856 = vrot.lane.b32.xlu0 %v716, 127
  %v857 = vpop.permute.xlu0 %856
  %v858 = vmul.f32 %v857, %v331
  %s859 = scalar_lea.vmem %s5, 40
  %v860 = vld [vmem:[%s859] sm:$0xff]
  %v862 = vsel %vm194, %v860, 0
  %864 = vmatpush.msra.mxu0 0.0
  %865 = vmatpush.msra.mxu0 0.0
  %866 = vmatpush.msra.mxu0 0.0
  %867 = vmatpush.msra.mxu0 0.0
  %868 = vmatpush.msra.mxu0 0.0
  %869 = vmatpush.msra.mxu0 0.0
  %870 = vmatpush.msra.mxu0 0.0
  %871 = vmatpush.msra.mxu0 0.0
  %872 = vmatpush.msra.mxu0 0.0
  %873 = vmatpush.msra.mxu0 0.0
  %874 = vmatpush.msra.mxu0 0.0
  %875 = vmatpush.msra.mxu0 0.0
  %876 = vmatpush.msra.mxu0 0.0
  %877 = vmatpush.msra.mxu0 0.0
  %878 = vmatpush.msra.mxu0 0.0
  %879 = vmatpush.msra.mxu0 %v858
  %880 = vmatmul.f32.gmra.mxu0 %v862
  %v881 = vpop.f32.mrf.mxu0
  %v882 = vadd.f32 0.0, %v881
  %883 = vdwg.mxu0
  %v884 = vadd.f32 %v855, %v882
  %885 = vrot.lane.b32.xlu0 %v716, 121
  %v886 = vpop.permute.xlu0 %885
  %v887 = vmul.f32 %v886, %v361
  %s888 = scalar_lea.vmem %s5, 48
  %v889 = vld [vmem:[%s888] sm:$0xff]
  %v891 = vsel %vm194, %v889, 0
  %893 = vmatpush.msra.mxu0 0.0
  %894 = vmatpush.msra.mxu0 0.0
  %895 = vmatpush.msra.mxu0 0.0
  %896 = vmatpush.msra.mxu0 0.0
  %897 = vmatpush.msra.mxu0 0.0
  %898 = vmatpush.msra.mxu0 0.0
  %899 = vmatpush.msra.mxu0 0.0
  %900 = vmatpush.msra.mxu0 0.0
  %901 = vmatpush.msra.mxu0 0.0
  %902 = vmatpush.msra.mxu0 0.0
  %903 = vmatpush.msra.mxu0 0.0
  %904 = vmatpush.msra.mxu0 0.0
  %905 = vmatpush.msra.mxu0 0.0
  %906 = vmatpush.msra.mxu0 0.0
  %907 = vmatpush.msra.mxu0 0.0
  %908 = vmatpush.msra.mxu0 %v887
  %909 = vmatmul.f32.gmra.mxu0 %v891
  %v910 = vpop.f32.mrf.mxu0
  %v911 = vadd.f32 0.0, %v910
  %912 = vdwg.mxu0
  %v913 = vadd.f32 %v884, %v911
  %914 = vrot.lane.b32.xlu0 %v716, 120
  %v915 = vpop.permute.xlu0 %914
  %v916 = vmul.f32 %v915, %v391
  %s917 = scalar_lea.vmem %s5, 56
  %v918 = vld [vmem:[%s917] sm:$0xff]
  %v920 = vsel %vm194, %v918, 0
  %922 = vmatpush.msra.mxu0 0.0
  %923 = vmatpush.msra.mxu0 0.0
  %924 = vmatpush.msra.mxu0 0.0
  %925 = vmatpush.msra.mxu0 0.0
  %926 = vmatpush.msra.mxu0 0.0
  %927 = vmatpush.msra.mxu0 0.0
  %928 = vmatpush.msra.mxu0 0.0
  %929 = vmatpush.msra.mxu0 0.0
  %930 = vmatpush.msra.mxu0 0.0
  %931 = vmatpush.msra.mxu0 0.0
  %932 = vmatpush.msra.mxu0 0.0
  %933 = vmatpush.msra.mxu0 0.0
  %934 = vmatpush.msra.mxu0 0.0
  %935 = vmatpush.msra.mxu0 0.0
  %936 = vmatpush.msra.mxu0 0.0
  %937 = vmatpush.msra.mxu0 %v916
  %938 = vmatmul.f32.gmra.mxu0 %v920
  %v939 = vpop.f32.mrf.mxu0
  %v940 = vadd.f32 0.0, %v939
  %941 = vdwg.mxu0
  %v942 = vadd.f32 %v913, %v940
  %943 = vrot.lane.b32.xlu0 %v716, 119
  %v944 = vpop.permute.xlu0 %943
  %v945 = vmul.f32 %v944, %v421
  %s946 = scalar_lea.vmem %s5, 64
  %v947 = vld [vmem:[%s946] sm:$0xff]
  %v949 = vsel %vm194, %v947, 0
  %951 = vmatpush.msra.mxu0 0.0
  %952 = vmatpush.msra.mxu0 0.0
  %953 = vmatpush.msra.mxu0 0.0
  %954 = vmatpush.msra.mxu0 0.0
  %955 = vmatpush.msra.mxu0 0.0
  %956 = vmatpush.msra.mxu0 0.0
  %957 = vmatpush.msra.mxu0 0.0
  %958 = vmatpush.msra.mxu0 0.0
  %959 = vmatpush.msra.mxu0 0.0
  %960 = vmatpush.msra.mxu0 0.0
  %961 = vmatpush.msra.mxu0 0.0
  %962 = vmatpush.msra.mxu0 0.0
  %963 = vmatpush.msra.mxu0 0.0
  %964 = vmatpush.msra.mxu0 0.0
  %965 = vmatpush.msra.mxu0 0.0
  %966 = vmatpush.msra.mxu0 %v945
  %967 = vmatmul.f32.gmra.mxu0 %v949
  %v968 = vpop.f32.mrf.mxu0
  %v969 = vadd.f32 0.0, %v968
  %970 = vdwg.mxu0
  %v971 = vadd.f32 %v942, %v969
  %v972 = vadd.f32 %v971, %v455
  %973 = vset.pattern.permute.xlu0 3
  %974 = vperm.xlu0 %973, %v29
  %v975 = vpop.permute.xlu0 %974
  %v977 = vmul.f32 %v975, %v972
  %978 = vset.pattern.permute.xlu0 4
  %979 = vperm.xlu0 %978, %v29
  %v980 = vpop.permute.xlu0 %979
  %v982 = vadd.f32 %v977, %v980
  %v983 = vmax.f32 %v982, 0.0
  %984 = vst [vmem:[%s8] sm:$0xff] %v983
  // Predicated region
  $region34: #{resnet_forward.1} parent=0 // pred_check
    _
  $region35: #{resnet_forward.1} parent=0 // pred_check_branch
    %986 = sbr.rel (0) target = $region37
  $region36: #{resnet_forward.1} parent=0 // pred_region
    _
  $region37: #{resnet_forward.1} parent=0 // pred_fallthru
    _
  // Predicated region
  $region38: #{resnet_forward.1} parent=0 // pred_check
    _
  $region39: #{resnet_forward.1} parent=0 // pred_check_branch
    %988 = sbr.rel (0) target = $region41
  $region40: #{resnet_forward.1} parent=0 // pred_region
    _
  $region41: #{resnet_forward.1} parent=0 // pred_fallthru
    _

</llo_original>
